<compile_context>
chip_gen: v7x
topology: tpu7x:2x2x1
jax: 0.10.0
libtpu: 0.0.40
codegen_flags: <defaults>
</compile_context>

<pallas_src>
import jax
import jax.numpy as jnp
from jax.experimental import pallas as pl
from jax.experimental.pallas import tpu as pltpu

BN_EPS = 1e-5


def _round_up(n, m):
    return ((n + m - 1) // m) * m


# ---------------------------------------------------------------------------
# Fused kernel: entire forward pass, built once from a static `plan`.
#   plan['first']  = (row_off, in_pad, out_pad)
#   plan['blocks'] = [{'fc1': spec, 'fc2': spec, 'proj': (spec, bias_row) | None}]
#   plan['out']    = (spec, bias_row)
# ---------------------------------------------------------------------------
def _make_fused_kernel(plan):

    def kernel(x_ref, w_ref, b_ref, o_ref):

        def linear(h, spec, bias_row=None):
            row, ip, op = spec
            w = w_ref[row:row + ip, :op]              # static, tile-aligned slice
            y = jnp.dot(h.astype(jnp.bfloat16), w,
                        preferred_element_type=jnp.float32)
            if bias_row is not None:
                y = y + b_ref[bias_row:bias_row + 1, :op]
            return y

        def bn(y, relu):
            # BatchNorm1d, training-mode batch stats, gamma=1/beta=0 folded.
            # Padded columns are exactly 0 -> stay exactly 0.
            mean = jnp.mean(y, axis=0, keepdims=True)
            var = jnp.mean(jnp.square(y - mean), axis=0, keepdims=True)
            yn = (y - mean) * jax.lax.rsqrt(var + BN_EPS)
            return jnp.maximum(yn, 0.0) if relu else yn

        h = x_ref[...]                                       # (B, in_pad) f32

        # first_layer: Linear (bias dropped, dead under BN) + BN + ReLU
        h = bn(linear(h, plan['first']), relu=True)

        # residual blocks
        for blk in plan['blocks']:
            residual = h
            t = bn(linear(h, blk['fc1']), relu=True)         # fc1: Lin+BN+ReLU
            y = bn(linear(t, blk['fc2']), relu=False)        # fc2: Lin+BN
            if blk['proj'] is not None:
                spec, brow = blk['proj']
                residual = linear(residual, spec, brow)      # skip projection
            h = jnp.maximum(y + residual, 0.0)

        # output_layer: plain Linear (keeps its bias)
        spec, brow = plan['out']
        o_ref[...] = linear(h, spec, brow).astype(o_ref.dtype)

    return kernel


# ---------------------------------------------------------------------------
# Init (PyTorch-style) + packing into slabs + jitted forward builder.
# ---------------------------------------------------------------------------
def _init_linear(key, in_f, out_f):
    kw, kb = jax.random.split(key)
    bound = 1.0 / float(in_f) ** 0.5
    w = jax.random.uniform(kw, (out_f, in_f), jnp.float32, -bound, bound)
    b = jax.random.uniform(kb, (out_f,), jnp.float32, -bound, bound)
    return w, b


def build_residual_mlp(key, layer_sizes, input_shape, *, lane=128):
    """Returns a jitted forward(x) for a fresh-init ResidualMLP.

    lane=128 matches the v5e MXU and is fine everywhere at small sizes;
    use lane=256 on v6e/v7x once layer widths make the kernel MXU-bound.
    """
    input_size = input_shape[0] * input_shape[1] * input_shape[2]
    pad = lambda n: _round_up(n, lane)

    # Enumerate every Linear in forward order: (in_f, out_f, has_bias)
    linears = [(input_size, layer_sizes[0], False)]           # first (BN follows)
    block_has_proj = []
    for i in range(len(layer_sizes) - 1):
        in_f, out_f = layer_sizes[i], layer_sizes[i + 1]
        linears.append((in_f, out_f, False))                  # fc1 (BN follows)
        linears.append((out_f, out_f, False))                 # fc2 (BN follows)
        if in_f != out_f:
            linears.append((in_f, out_f, True))               # projection
        block_has_proj.append(in_f != out_f)
    linears.append((layer_sizes[-1], layer_sizes[-1], True))  # output layer

    max_out_pad = max(pad(o) for (_, o, _) in linears)
    keys = jax.random.split(key, len(linears))

    # Pack: one bf16 weight slab (rows = concatenated in_pad's, width = max_out_pad)
    # and one f32 bias slab (one row per biased Linear).
    w_rows, b_rows, specs, bias_rows = [], [], [], []
    row_off = 0
    for k, (in_f, out_f, has_bias) in zip(keys, linears):
        in_pad, out_pad = pad(in_f), pad(out_f)
        w, b = _init_linear(k, in_f, out_f)
        wt = jnp.zeros((in_pad, max_out_pad), jnp.float32).at[:in_f, :out_f].set(w.T)
        w_rows.append(wt.astype(jnp.bfloat16))
        specs.append((row_off, in_pad, out_pad))
        row_off += in_pad
        if has_bias:
            br = jnp.zeros((1, max_out_pad), jnp.float32).at[0, :out_f].set(b)
            bias_rows.append(len(b_rows))
            b_rows.append(br)
        else:
            bias_rows.append(None)

    w_slab = jnp.concatenate(w_rows, axis=0)                          # bf16
    b_slab = (jnp.concatenate(b_rows, axis=0) if b_rows
              else jnp.zeros((1, max_out_pad), jnp.float32))          # f32

    # Static plan for the kernel.
    li = 0
    plan = {'first': specs[li]}
    li += 1
    blocks = []
    for has_proj in block_has_proj:
        fc1, fc2 = specs[li], specs[li + 1]
        li += 2
        proj = None
        if has_proj:
            proj = (specs[li], bias_rows[li])
            li += 1
        blocks.append({'fc1': fc1, 'fc2': fc2, 'proj': proj})
    plan['blocks'] = blocks
    plan['out'] = (specs[li], bias_rows[li])

    kernel = _make_fused_kernel(plan)                # built ONCE

    in_pad0 = pad(input_size)
    out_f, out_pad = layer_sizes[-1], pad(layer_sizes[-1])
    vmem = pl.BlockSpec(memory_space=pltpu.MemorySpace.VMEM)

    # Explicit VMEM budget so the same code scales on v7x (64 MiB physical) and
    # v5e (16 MiB default scoped limit).  Here the footprint is < 1 MiB.
    slab_bytes = int(w_slab.size) * 2 + int(b_slab.size) * 4
    vmem_limit = int(min(max(4 * slab_bytes + (1 << 20), 16 << 20), 48 << 20))
    compiler_params = pltpu.CompilerParams(vmem_limit_bytes=vmem_limit)

    @jax.jit
    def _forward(x, w_slab, b_slab):
        B = x.shape[0]
        h = x.reshape(B, -1).astype(jnp.float32)     # torch: x.view(x.size(0), -1)
        if in_pad0 != input_size:
            h = jnp.pad(h, ((0, 0), (0, in_pad0 - input_size)))
        out = pl.pallas_call(
            kernel,
            out_shape=jax.ShapeDtypeStruct((B, out_pad), jnp.float32),
            in_specs=[vmem, vmem, vmem],             # x, weight slab, bias slab
            out_specs=vmem,
            compiler_params=compiler_params,
        )(h, w_slab, b_slab)
        return out[:, :out_f]

    def forward(x):
        return _forward(x, w_slab, b_slab)

    return forward


# ---------------------------------------------------------------------------
if __name__ == "__main__":
    key = jax.random.PRNGKey(0)
    k_x, k_p = jax.random.split(key)

    batch = 2
    input_shape = (4, 16, 16)            # (C, H, W)  -> flattened 1024
    layer_sizes = [32, 32, 64]           # exercises same-dim and projection paths

    x = jax.random.normal(k_x, (batch,) + input_shape, dtype=jnp.float32)
    forward = build_residual_mlp(k_p, layer_sizes, input_shape)

    out = jax.block_until_ready(forward(x))

    assert out.shape == (batch, layer_sizes[-1]), out.shape
    assert bool(jnp.all(jnp.isfinite(out)))
    print("KERNEL_OK")
</pallas_src>

<mosaic_0001>
module attributes {stable_mosaic.version = 11 : i64} {
  func.func @kernel(%arg0: memref<2x1024xf32, #tpu.memory_space<vmem>>, %arg1: memref<1792x128xbf16, #tpu.memory_space<vmem>>, %arg2: memref<2x128xf32, #tpu.memory_space<vmem>>, %arg3: memref<2x128xf32, #tpu.memory_space<vmem>>) attributes {dimension_semantics = [], scalar_prefetch = 0 : i64, scratch_operands = 0 : i64, tpu.core_type = #tpu.core_type<tc>} {
    %c0 = arith.constant 0 : index
    %c0_0 = arith.constant 0 : index
    %0 = vector.load %arg0[%c0, %c0_0] : memref<2x1024xf32, #tpu.memory_space<vmem>>, vector<2x1024xf32>
    %c0_1 = arith.constant 0 : index
    %c0_2 = arith.constant 0 : index
    %1 = vector.load %arg1[%c0_1, %c0_2] : memref<1792x128xbf16, #tpu.memory_space<vmem>>, vector<1024x128xbf16>
    %2 = arith.truncf %0 : vector<2x1024xf32> to vector<2x1024xbf16>
    %cst = arith.constant dense<0.000000e+00> : vector<2x128xf32>
    %3 = tpu.matmul %2, %1, %cst {dimension_numbers = #tpu.dot_dimension_numbers<[1], [0], [0], [1], [0, 0, 1, 1], [], []>} : vector<2x1024xbf16>, vector<1024x128xbf16>, vector<2x128xf32> -> vector<2x128xf32>
    %cst_3 = arith.constant dense<0.000000e+00> : vector<128xf32>
    %4 = vector.multi_reduction <add>, %3, %cst_3 [0] : vector<2x128xf32> to vector<128xf32>
    %5 = vector.shape_cast %4 : vector<128xf32> to vector<1x128xf32>
    %cst_4 = arith.constant 2.000000e+00 : f32
    %6 = vector.broadcast %cst_4 : f32 to vector<1x128xf32>
    %7 = arith.divf %5, %6 : vector<1x128xf32>
    %8 = vector.broadcast %7 : vector<1x128xf32> to vector<2x128xf32>
    %9 = arith.subf %3, %8 : vector<2x128xf32>
    %10 = arith.mulf %9, %9 : vector<2x128xf32>
    %cst_5 = arith.constant dense<0.000000e+00> : vector<128xf32>
    %11 = vector.multi_reduction <add>, %10, %cst_5 [0] : vector<2x128xf32> to vector<128xf32>
    %12 = vector.shape_cast %11 : vector<128xf32> to vector<1x128xf32>
    %cst_6 = arith.constant 2.000000e+00 : f32
    %13 = vector.broadcast %cst_6 : f32 to vector<1x128xf32>
    %14 = arith.divf %12, %13 : vector<1x128xf32>
    %15 = vector.broadcast %7 : vector<1x128xf32> to vector<2x128xf32>
    %16 = arith.subf %3, %15 : vector<2x128xf32>
    %cst_7 = arith.constant 9.99999974E-6 : f32
    %17 = vector.broadcast %cst_7 : f32 to vector<1x128xf32>
    %18 = arith.addf %14, %17 : vector<1x128xf32>
    %19 = math.rsqrt %18 : vector<1x128xf32>
    %20 = vector.broadcast %19 : vector<1x128xf32> to vector<2x128xf32>
    %21 = arith.mulf %16, %20 : vector<2x128xf32>
    %cst_8 = arith.constant 0.000000e+00 : f32
    %22 = vector.broadcast %cst_8 : f32 to vector<2x128xf32>
    %23 = arith.maximumf %21, %22 : vector<2x128xf32>
    %c1024 = arith.constant 1024 : index
    %c0_9 = arith.constant 0 : index
    %24 = vector.load %arg1[%c1024, %c0_9] : memref<1792x128xbf16, #tpu.memory_space<vmem>>, vector<128x128xbf16>
    %25 = arith.truncf %23 : vector<2x128xf32> to vector<2x128xbf16>
    %cst_10 = arith.constant dense<0.000000e+00> : vector<2x128xf32>
    %26 = tpu.matmul %25, %24, %cst_10 {dimension_numbers = #tpu.dot_dimension_numbers<[1], [0], [0], [1], [0, 0, 1, 1], [], []>} : vector<2x128xbf16>, vector<128x128xbf16>, vector<2x128xf32> -> vector<2x128xf32>
    %cst_11 = arith.constant dense<0.000000e+00> : vector<128xf32>
    %27 = vector.multi_reduction <add>, %26, %cst_11 [0] : vector<2x128xf32> to vector<128xf32>
    %28 = vector.shape_cast %27 : vector<128xf32> to vector<1x128xf32>
    %cst_12 = arith.constant 2.000000e+00 : f32
    %29 = vector.broadcast %cst_12 : f32 to vector<1x128xf32>
    %30 = arith.divf %28, %29 : vector<1x128xf32>
    %31 = vector.broadcast %30 : vector<1x128xf32> to vector<2x128xf32>
    %32 = arith.subf %26, %31 : vector<2x128xf32>
    %33 = arith.mulf %32, %32 : vector<2x128xf32>
    %cst_13 = arith.constant dense<0.000000e+00> : vector<128xf32>
    %34 = vector.multi_reduction <add>, %33, %cst_13 [0] : vector<2x128xf32> to vector<128xf32>
    %35 = vector.shape_cast %34 : vector<128xf32> to vector<1x128xf32>
    %cst_14 = arith.constant 2.000000e+00 : f32
    %36 = vector.broadcast %cst_14 : f32 to vector<1x128xf32>
    %37 = arith.divf %35, %36 : vector<1x128xf32>
    %38 = vector.broadcast %30 : vector<1x128xf32> to vector<2x128xf32>
    %39 = arith.subf %26, %38 : vector<2x128xf32>
    %cst_15 = arith.constant 9.99999974E-6 : f32
    %40 = vector.broadcast %cst_15 : f32 to vector<1x128xf32>
    %41 = arith.addf %37, %40 : vector<1x128xf32>
    %42 = math.rsqrt %41 : vector<1x128xf32>
    %43 = vector.broadcast %42 : vector<1x128xf32> to vector<2x128xf32>
    %44 = arith.mulf %39, %43 : vector<2x128xf32>
    %cst_16 = arith.constant 0.000000e+00 : f32
    %45 = vector.broadcast %cst_16 : f32 to vector<2x128xf32>
    %46 = arith.maximumf %44, %45 : vector<2x128xf32>
    %c1152 = arith.constant 1152 : index
    %c0_17 = arith.constant 0 : index
    %47 = vector.load %arg1[%c1152, %c0_17] : memref<1792x128xbf16, #tpu.memory_space<vmem>>, vector<128x128xbf16>
    %48 = arith.truncf %46 : vector<2x128xf32> to vector<2x128xbf16>
    %cst_18 = arith.constant dense<0.000000e+00> : vector<2x128xf32>
    %49 = tpu.matmul %48, %47, %cst_18 {dimension_numbers = #tpu.dot_dimension_numbers<[1], [0], [0], [1], [0, 0, 1, 1], [], []>} : vector<2x128xbf16>, vector<128x128xbf16>, vector<2x128xf32> -> vector<2x128xf32>
    %cst_19 = arith.constant dense<0.000000e+00> : vector<128xf32>
    %50 = vector.multi_reduction <add>, %49, %cst_19 [0] : vector<2x128xf32> to vector<128xf32>
    %51 = vector.shape_cast %50 : vector<128xf32> to vector<1x128xf32>
    %cst_20 = arith.constant 2.000000e+00 : f32
    %52 = vector.broadcast %cst_20 : f32 to vector<1x128xf32>
    %53 = arith.divf %51, %52 : vector<1x128xf32>
    %54 = vector.broadcast %53 : vector<1x128xf32> to vector<2x128xf32>
    %55 = arith.subf %49, %54 : vector<2x128xf32>
    %56 = arith.mulf %55, %55 : vector<2x128xf32>
    %cst_21 = arith.constant dense<0.000000e+00> : vector<128xf32>
    %57 = vector.multi_reduction <add>, %56, %cst_21 [0] : vector<2x128xf32> to vector<128xf32>
    %58 = vector.shape_cast %57 : vector<128xf32> to vector<1x128xf32>
    %cst_22 = arith.constant 2.000000e+00 : f32
    %59 = vector.broadcast %cst_22 : f32 to vector<1x128xf32>
    %60 = arith.divf %58, %59 : vector<1x128xf32>
    %61 = vector.broadcast %53 : vector<1x128xf32> to vector<2x128xf32>
    %62 = arith.subf %49, %61 : vector<2x128xf32>
    %cst_23 = arith.constant 9.99999974E-6 : f32
    %63 = vector.broadcast %cst_23 : f32 to vector<1x128xf32>
    %64 = arith.addf %60, %63 : vector<1x128xf32>
    %65 = math.rsqrt %64 : vector<1x128xf32>
    %66 = vector.broadcast %65 : vector<1x128xf32> to vector<2x128xf32>
    %67 = arith.mulf %62, %66 : vector<2x128xf32>
    %68 = arith.addf %67, %23 : vector<2x128xf32>
    %cst_24 = arith.constant 0.000000e+00 : f32
    %69 = vector.broadcast %cst_24 : f32 to vector<2x128xf32>
    %70 = arith.maximumf %68, %69 : vector<2x128xf32>
    %c1280 = arith.constant 1280 : index
    %c0_25 = arith.constant 0 : index
    %71 = vector.load %arg1[%c1280, %c0_25] : memref<1792x128xbf16, #tpu.memory_space<vmem>>, vector<128x128xbf16>
    %72 = arith.truncf %70 : vector<2x128xf32> to vector<2x128xbf16>
    %cst_26 = arith.constant dense<0.000000e+00> : vector<2x128xf32>
    %73 = tpu.matmul %72, %71, %cst_26 {dimension_numbers = #tpu.dot_dimension_numbers<[1], [0], [0], [1], [0, 0, 1, 1], [], []>} : vector<2x128xbf16>, vector<128x128xbf16>, vector<2x128xf32> -> vector<2x128xf32>
    %cst_27 = arith.constant dense<0.000000e+00> : vector<128xf32>
    %74 = vector.multi_reduction <add>, %73, %cst_27 [0] : vector<2x128xf32> to vector<128xf32>
    %75 = vector.shape_cast %74 : vector<128xf32> to vector<1x128xf32>
    %cst_28 = arith.constant 2.000000e+00 : f32
    %76 = vector.broadcast %cst_28 : f32 to vector<1x128xf32>
    %77 = arith.divf %75, %76 : vector<1x128xf32>
    %78 = vector.broadcast %77 : vector<1x128xf32> to vector<2x128xf32>
    %79 = arith.subf %73, %78 : vector<2x128xf32>
    %80 = arith.mulf %79, %79 : vector<2x128xf32>
    %cst_29 = arith.constant dense<0.000000e+00> : vector<128xf32>
    %81 = vector.multi_reduction <add>, %80, %cst_29 [0] : vector<2x128xf32> to vector<128xf32>
    %82 = vector.shape_cast %81 : vector<128xf32> to vector<1x128xf32>
    %cst_30 = arith.constant 2.000000e+00 : f32
    %83 = vector.broadcast %cst_30 : f32 to vector<1x128xf32>
    %84 = arith.divf %82, %83 : vector<1x128xf32>
    %85 = vector.broadcast %77 : vector<1x128xf32> to vector<2x128xf32>
    %86 = arith.subf %73, %85 : vector<2x128xf32>
    %cst_31 = arith.constant 9.99999974E-6 : f32
    %87 = vector.broadcast %cst_31 : f32 to vector<1x128xf32>
    %88 = arith.addf %84, %87 : vector<1x128xf32>
    %89 = math.rsqrt %88 : vector<1x128xf32>
    %90 = vector.broadcast %89 : vector<1x128xf32> to vector<2x128xf32>
    %91 = arith.mulf %86, %90 : vector<2x128xf32>
    %cst_32 = arith.constant 0.000000e+00 : f32
    %92 = vector.broadcast %cst_32 : f32 to vector<2x128xf32>
    %93 = arith.maximumf %91, %92 : vector<2x128xf32>
    %c1408 = arith.constant 1408 : index
    %c0_33 = arith.constant 0 : index
    %94 = vector.load %arg1[%c1408, %c0_33] : memref<1792x128xbf16, #tpu.memory_space<vmem>>, vector<128x128xbf16>
    %95 = arith.truncf %93 : vector<2x128xf32> to vector<2x128xbf16>
    %cst_34 = arith.constant dense<0.000000e+00> : vector<2x128xf32>
    %96 = tpu.matmul %95, %94, %cst_34 {dimension_numbers = #tpu.dot_dimension_numbers<[1], [0], [0], [1], [0, 0, 1, 1], [], []>} : vector<2x128xbf16>, vector<128x128xbf16>, vector<2x128xf32> -> vector<2x128xf32>
    %cst_35 = arith.constant dense<0.000000e+00> : vector<128xf32>
    %97 = vector.multi_reduction <add>, %96, %cst_35 [0] : vector<2x128xf32> to vector<128xf32>
    %98 = vector.shape_cast %97 : vector<128xf32> to vector<1x128xf32>
    %cst_36 = arith.constant 2.000000e+00 : f32
    %99 = vector.broadcast %cst_36 : f32 to vector<1x128xf32>
    %100 = arith.divf %98, %99 : vector<1x128xf32>
    %101 = vector.broadcast %100 : vector<1x128xf32> to vector<2x128xf32>
    %102 = arith.subf %96, %101 : vector<2x128xf32>
    %103 = arith.mulf %102, %102 : vector<2x128xf32>
    %cst_37 = arith.constant dense<0.000000e+00> : vector<128xf32>
    %104 = vector.multi_reduction <add>, %103, %cst_37 [0] : vector<2x128xf32> to vector<128xf32>
    %105 = vector.shape_cast %104 : vector<128xf32> to vector<1x128xf32>
    %cst_38 = arith.constant 2.000000e+00 : f32
    %106 = vector.broadcast %cst_38 : f32 to vector<1x128xf32>
    %107 = arith.divf %105, %106 : vector<1x128xf32>
    %108 = vector.broadcast %100 : vector<1x128xf32> to vector<2x128xf32>
    %109 = arith.subf %96, %108 : vector<2x128xf32>
    %cst_39 = arith.constant 9.99999974E-6 : f32
    %110 = vector.broadcast %cst_39 : f32 to vector<1x128xf32>
    %111 = arith.addf %107, %110 : vector<1x128xf32>
    %112 = math.rsqrt %111 : vector<1x128xf32>
    %113 = vector.broadcast %112 : vector<1x128xf32> to vector<2x128xf32>
    %114 = arith.mulf %109, %113 : vector<2x128xf32>
    %c1536 = arith.constant 1536 : index
    %c0_40 = arith.constant 0 : index
    %115 = vector.load %arg1[%c1536, %c0_40] : memref<1792x128xbf16, #tpu.memory_space<vmem>>, vector<128x128xbf16>
    %116 = arith.truncf %70 : vector<2x128xf32> to vector<2x128xbf16>
    %cst_41 = arith.constant dense<0.000000e+00> : vector<2x128xf32>
    %117 = tpu.matmul %116, %115, %cst_41 {dimension_numbers = #tpu.dot_dimension_numbers<[1], [0], [0], [1], [0, 0, 1, 1], [], []>} : vector<2x128xbf16>, vector<128x128xbf16>, vector<2x128xf32> -> vector<2x128xf32>
    %c0_42 = arith.constant 0 : index
    %c0_43 = arith.constant 0 : index
    %118 = vector.load %arg2[%c0_42, %c0_43] : memref<2x128xf32, #tpu.memory_space<vmem>>, vector<1x128xf32>
    %119 = vector.broadcast %118 : vector<1x128xf32> to vector<2x128xf32>
    %120 = arith.addf %117, %119 : vector<2x128xf32>
    %121 = arith.addf %114, %120 : vector<2x128xf32>
    %cst_44 = arith.constant 0.000000e+00 : f32
    %122 = vector.broadcast %cst_44 : f32 to vector<2x128xf32>
    %123 = arith.maximumf %121, %122 : vector<2x128xf32>
    %c1664 = arith.constant 1664 : index
    %c0_45 = arith.constant 0 : index
    %124 = vector.load %arg1[%c1664, %c0_45] : memref<1792x128xbf16, #tpu.memory_space<vmem>>, vector<128x128xbf16>
    %125 = arith.truncf %123 : vector<2x128xf32> to vector<2x128xbf16>
    %cst_46 = arith.constant dense<0.000000e+00> : vector<2x128xf32>
    %126 = tpu.matmul %125, %124, %cst_46 {dimension_numbers = #tpu.dot_dimension_numbers<[1], [0], [0], [1], [0, 0, 1, 1], [], []>} : vector<2x128xbf16>, vector<128x128xbf16>, vector<2x128xf32> -> vector<2x128xf32>
    %c1 = arith.constant 1 : index
    %c0_47 = arith.constant 0 : index
    %127 = vector.load %arg2[%c1, %c0_47] : memref<2x128xf32, #tpu.memory_space<vmem>>, vector<1x128xf32>
    %128 = vector.broadcast %127 : vector<1x128xf32> to vector<2x128xf32>
    %129 = arith.addf %126, %128 : vector<2x128xf32>
    %c0_48 = arith.constant 0 : index
    %c0_49 = arith.constant 0 : index
    %130 = vector.load %arg3[%c0_48, %c0_49] : memref<2x128xf32, #tpu.memory_space<vmem>>, vector<2x128xf32>
    tpu.vector_store %arg3[%c0_48, %c0_49], %129 {strides = array<i32>} : memref<2x128xf32, #tpu.memory_space<vmem>>, vector<2x128xf32>,
    return
  }
}

</mosaic_0001>

<llo_original>
// kernel: _forward.1
$region0: #{_forward.1}
  #allocation0 [shape = 'u32[]', space=smem, size = 0x4, offset = 0x4, fixed_abs, tag = 'smem constant byte address 0x4 - core index']
  #allocation1 [shape = 'u32[144,128]{1,0:T(1,128)}', space=vmem, size = 0x12000, scoped, tag = 'internal scratch']
  %s0 = inlined_call_operand.vmem [shape: f32[2,1024], index: 0, kind: input, shape index: {}]
  %s1 = inlined_call_operand.hbm [shape: bf16[1792,128], index: 1, kind: input, shape index: {}]
  %s2 = inlined_call_operand.vmem [shape: f32[2,128], index: 2, kind: input, shape index: {}]
  %s3 = inlined_call_operand.hbm [shape: f32[2,128], index: 3, kind: output, shape index: {}]
  %s4 = sld [smem:[#allocation0]]
  $region26: #{_forward.1} parent=0
    _
  %s6 = ssub.s32 1, %s4
  %s7 = scalar_select 0, %s6, %s4
  $region1: #{_forward.1} parent=0
    #allocation2 [shape = 'u8[458752]{0}', space=vmem, size = 0x70000, scoped, tag = 'input window, operand 1, single buffered']
    #allocation3 [shape = 's32[1]{0}', space=sflag, size = 0x4, scoped, tag = 'scoped memory for _forward.1']
    #allocation4 [shape = 's32[1]{0}', space=sflag, size = 0x4, scoped, tag = 'scoped memory for _forward.1']
    #allocation5 [shape = 'u8[1024]{0}', space=vmem, size = 0x400, scoped, tag = 'output window, operand 0, single buffered']
    %8 = vsyncpa [#allocation3], 0
    %9 = vsyncpa [#allocation4], 0
    // Predicated region
    $region2: #{_forward.1} parent=1 // pred_check
      _
    $region3: #{_forward.1} parent=1 // pred_check_branch
      %11 = sbr.rel (0) target = $region5
    $region4: #{_forward.1} parent=1 // pred_region
      _
    $region5: #{_forward.1} parent=1 // pred_fallthru
      _
    // Predicated region
    $region6: #{_forward.1} parent=1 // pred_check
      _
    $region7: #{_forward.1} parent=1 // pred_check_branch
      %13 = sbr.rel (0) target = $region9
    $region8: #{_forward.1} parent=1 // pred_region
      %s15 = ssub.s32 14336, 14336
      %16 = vsyncadd [#allocation3], %s15
      %s17 = sshll.u32 [#allocation2], 4
      %s18 = int_to_ptr.vmem [resolvable:$true] %s17
      %23 = dma.hbm_to_vmem [thread:$0]  %s1, 14336, %s18, [#allocation3], 64, 64, 4
    $region9: #{_forward.1} parent=1 // pred_fallthru
      _
    // Predicated region
    $region10: #{_forward.1} parent=1 // pred_check
      _
    $region11: #{_forward.1} parent=1 // pred_check_branch
      %25 = sbr.rel (0) target = $region13
    $region12: #{_forward.1} parent=1 // pred_region
      _
    $region13: #{_forward.1} parent=1 // pred_fallthru
      _
    // Predicated region
    $region14: #{_forward.1} parent=1 // pred_check
      _
    $region15: #{_forward.1} parent=1 // pred_check_branch
      %27 = sbr.rel (0) target = $region17
    $region16: #{_forward.1} parent=1 // pred_region
      %28 = dma.done [#allocation3], 14336
    $region17: #{_forward.1} parent=1 // pred_fallthru
      _
    %v30 = vld [vmem:[%s0] sm:$0xff]
    %v31 = vld [vmem:[%s0 + $0x8] sm:$0xff]
    %v32 = vld [vmem:[#allocation2] sm:$0xf]
    %v33 = vld [vmem:[#allocation2 + $0x4] sm:$0xf]
    %v34 = vld [vmem:[#allocation2 + $0x8] sm:$0xf]
    %v35 = vld [vmem:[#allocation2 + $0xc] sm:$0xf]
    %v36 = vld [vmem:[#allocation2 + $0x10] sm:$0xf]
    %v37 = vld [vmem:[#allocation2 + $0x14] sm:$0xf]
    %v38 = vld [vmem:[#allocation2 + $0x18] sm:$0xf]
    %v39 = vld [vmem:[#allocation2 + $0x1c] sm:$0xf]
    %v40 = vld [vmem:[#allocation2 + $0x20] sm:$0xf]
    %v41 = vld [vmem:[#allocation2 + $0x24] sm:$0xf]
    %v42 = vld [vmem:[#allocation2 + $0x28] sm:$0xf]
    %v43 = vld [vmem:[#allocation2 + $0x2c] sm:$0xf]
    %v44 = vld [vmem:[#allocation2 + $0x30] sm:$0xf]
    %v45 = vld [vmem:[#allocation2 + $0x34] sm:$0xf]
    %v46 = vld [vmem:[#allocation2 + $0x38] sm:$0xf]
    %v47 = vld [vmem:[#allocation2 + $0x3c] sm:$0xf]
    %v48 = vld [vmem:[#allocation2 + $0x40] sm:$0xf]
    %v49 = vld [vmem:[#allocation2 + $0x44] sm:$0xf]
    %v50 = vld [vmem:[#allocation2 + $0x48] sm:$0xf]
    %v51 = vld [vmem:[#allocation2 + $0x4c] sm:$0xf]
    %v52 = vld [vmem:[#allocation2 + $0x50] sm:$0xf]
    %v53 = vld [vmem:[#allocation2 + $0x54] sm:$0xf]
    %v54 = vld [vmem:[#allocation2 + $0x58] sm:$0xf]
    %v55 = vld [vmem:[#allocation2 + $0x5c] sm:$0xf]
    %v56 = vld [vmem:[#allocation2 + $0x60] sm:$0xf]
    %v57 = vld [vmem:[#allocation2 + $0x64] sm:$0xf]
    %v58 = vld [vmem:[#allocation2 + $0x68] sm:$0xf]
    %v59 = vld [vmem:[#allocation2 + $0x6c] sm:$0xf]
    %v60 = vld [vmem:[#allocation2 + $0x70] sm:$0xf]
    %v61 = vld [vmem:[#allocation2 + $0x74] sm:$0xf]
    %v62 = vld [vmem:[#allocation2 + $0x78] sm:$0xf]
    %v63 = vld [vmem:[#allocation2 + $0x7c] sm:$0xf]
    %v64 = vld [vmem:[#allocation2 + $0x80] sm:$0xf]
    %v65 = vld [vmem:[#allocation2 + $0x84] sm:$0xf]
    %v66 = vld [vmem:[#allocation2 + $0x88] sm:$0xf]
    %v67 = vld [vmem:[#allocation2 + $0x8c] sm:$0xf]
    %v68 = vld [vmem:[#allocation2 + $0x90] sm:$0xf]
    %v69 = vld [vmem:[#allocation2 + $0x94] sm:$0xf]
    %v70 = vld [vmem:[#allocation2 + $0x98] sm:$0xf]
    %v71 = vld [vmem:[#allocation2 + $0x9c] sm:$0xf]
    %v72 = vld [vmem:[#allocation2 + $0xa0] sm:$0xf]
    %v73 = vld [vmem:[#allocation2 + $0xa4] sm:$0xf]
    %v74 = vld [vmem:[#allocation2 + $0xa8] sm:$0xf]
    %v75 = vld [vmem:[#allocation2 + $0xac] sm:$0xf]
    %v76 = vld [vmem:[#allocation2 + $0xb0] sm:$0xf]
    %v77 = vld [vmem:[#allocation2 + $0xb4] sm:$0xf]
    %v78 = vld [vmem:[#allocation2 + $0xb8] sm:$0xf]
    %v79 = vld [vmem:[#allocation2 + $0xbc] sm:$0xf]
    %v80 = vld [vmem:[#allocation2 + $0xc0] sm:$0xf]
    %v81 = vld [vmem:[#allocation2 + $0xc4] sm:$0xf]
    %v82 = vld [vmem:[#allocation2 + $0xc8] sm:$0xf]
    %v83 = vld [vmem:[#allocation2 + $0xcc] sm:$0xf]
    %v84 = vld [vmem:[#allocation2 + $0xd0] sm:$0xf]
    %v85 = vld [vmem:[#allocation2 + $0xd4] sm:$0xf]
    %v86 = vld [vmem:[#allocation2 + $0xd8] sm:$0xf]
    %v87 = vld [vmem:[#allocation2 + $0xdc] sm:$0xf]
    %v88 = vld [vmem:[#allocation2 + $0xe0] sm:$0xf]
    %v89 = vld [vmem:[#allocation2 + $0xe4] sm:$0xf]
    %v90 = vld [vmem:[#allocation2 + $0xe8] sm:$0xf]
    %v91 = vld [vmem:[#allocation2 + $0xec] sm:$0xf]
    %v92 = vld [vmem:[#allocation2 + $0xf0] sm:$0xf]
    %v93 = vld [vmem:[#allocation2 + $0xf4] sm:$0xf]
    %v94 = vld [vmem:[#allocation2 + $0xf8] sm:$0xf]
    %v95 = vld [vmem:[#allocation2 + $0xfc] sm:$0xf]
    %v96 = vld [vmem:[#allocation2 + $0x100] sm:$0xf]
    %v97 = vld [vmem:[#allocation2 + $0x104] sm:$0xf]
    %v98 = vld [vmem:[#allocation2 + $0x108] sm:$0xf]
    %v99 = vld [vmem:[#allocation2 + $0x10c] sm:$0xf]
    %v100 = vld [vmem:[#allocation2 + $0x110] sm:$0xf]
    %v101 = vld [vmem:[#allocation2 + $0x114] sm:$0xf]
    %v102 = vld [vmem:[#allocation2 + $0x118] sm:$0xf]
    %v103 = vld [vmem:[#allocation2 + $0x11c] sm:$0xf]
    %v104 = vld [vmem:[#allocation2 + $0x120] sm:$0xf]
    %v105 = vld [vmem:[#allocation2 + $0x124] sm:$0xf]
    %v106 = vld [vmem:[#allocation2 + $0x128] sm:$0xf]
    %v107 = vld [vmem:[#allocation2 + $0x12c] sm:$0xf]
    %v108 = vld [vmem:[#allocation2 + $0x130] sm:$0xf]
    %v109 = vld [vmem:[#allocation2 + $0x134] sm:$0xf]
    %v110 = vld [vmem:[#allocation2 + $0x138] sm:$0xf]
    %v111 = vld [vmem:[#allocation2 + $0x13c] sm:$0xf]
    %v112 = vld [vmem:[#allocation2 + $0x140] sm:$0xf]
    %v113 = vld [vmem:[#allocation2 + $0x144] sm:$0xf]
    %v114 = vld [vmem:[#allocation2 + $0x148] sm:$0xf]
    %v115 = vld [vmem:[#allocation2 + $0x14c] sm:$0xf]
    %v116 = vld [vmem:[#allocation2 + $0x150] sm:$0xf]
    %v117 = vld [vmem:[#allocation2 + $0x154] sm:$0xf]
    %v118 = vld [vmem:[#allocation2 + $0x158] sm:$0xf]
    %v119 = vld [vmem:[#allocation2 + $0x15c] sm:$0xf]
    %v120 = vld [vmem:[#allocation2 + $0x160] sm:$0xf]
    %v121 = vld [vmem:[#allocation2 + $0x164] sm:$0xf]
    %v122 = vld [vmem:[#allocation2 + $0x168] sm:$0xf]
    %v123 = vld [vmem:[#allocation2 + $0x16c] sm:$0xf]
    %v124 = vld [vmem:[#allocation2 + $0x170] sm:$0xf]
    %v125 = vld [vmem:[#allocation2 + $0x174] sm:$0xf]
    %v126 = vld [vmem:[#allocation2 + $0x178] sm:$0xf]
    %v127 = vld [vmem:[#allocation2 + $0x17c] sm:$0xf]
    %v128 = vld [vmem:[#allocation2 + $0x180] sm:$0xf]
    %v129 = vld [vmem:[#allocation2 + $0x184] sm:$0xf]
    %v130 = vld [vmem:[#allocation2 + $0x188] sm:$0xf]
    %v131 = vld [vmem:[#allocation2 + $0x18c] sm:$0xf]
    %v132 = vld [vmem:[#allocation2 + $0x190] sm:$0xf]
    %v133 = vld [vmem:[#allocation2 + $0x194] sm:$0xf]
    %v134 = vld [vmem:[#allocation2 + $0x198] sm:$0xf]
    %v135 = vld [vmem:[#allocation2 + $0x19c] sm:$0xf]
    %v136 = vld [vmem:[#allocation2 + $0x1a0] sm:$0xf]
    %v137 = vld [vmem:[#allocation2 + $0x1a4] sm:$0xf]
    %v138 = vld [vmem:[#allocation2 + $0x1a8] sm:$0xf]
    %v139 = vld [vmem:[#allocation2 + $0x1ac] sm:$0xf]
    %v140 = vld [vmem:[#allocation2 + $0x1b0] sm:$0xf]
    %v141 = vld [vmem:[#allocation2 + $0x1b4] sm:$0xf]
    %v142 = vld [vmem:[#allocation2 + $0x1b8] sm:$0xf]
    %v143 = vld [vmem:[#allocation2 + $0x1bc] sm:$0xf]
    %v144 = vld [vmem:[#allocation2 + $0x1c0] sm:$0xf]
    %v145 = vld [vmem:[#allocation2 + $0x1c4] sm:$0xf]
    %v146 = vld [vmem:[#allocation2 + $0x1c8] sm:$0xf]
    %v147 = vld [vmem:[#allocation2 + $0x1cc] sm:$0xf]
    %v148 = vld [vmem:[#allocation2 + $0x1d0] sm:$0xf]
    %v149 = vld [vmem:[#allocation2 + $0x1d4] sm:$0xf]
    %v150 = vld [vmem:[#allocation2 + $0x1d8] sm:$0xf]
    %v151 = vld [vmem:[#allocation2 + $0x1dc] sm:$0xf]
    %v152 = vld [vmem:[#allocation2 + $0x1e0] sm:$0xf]
    %v153 = vld [vmem:[#allocation2 + $0x1e4] sm:$0xf]
    %v154 = vld [vmem:[#allocation2 + $0x1e8] sm:$0xf]
    %v155 = vld [vmem:[#allocation2 + $0x1ec] sm:$0xf]
    %v156 = vld [vmem:[#allocation2 + $0x1f0] sm:$0xf]
    %v157 = vld [vmem:[#allocation2 + $0x1f4] sm:$0xf]
    %v158 = vld [vmem:[#allocation2 + $0x1f8] sm:$0xf]
    %v159 = vld [vmem:[#allocation2 + $0x1fc] sm:$0xf]
    %v162 = vcombine.high %v30, %v30
    %v164 = vunpack.c.l.s4 1983009808
    %v165 = vunpack.c.0.s8 %v164
    %v166 = vlaneseq
    %v167 = vshrl.u32 %v166, 7
    %v168 = vsub.s32 %v165, %v167
    %v169 = vrot.slane %v30, %v168
    %v171 = vunpack.c.l.s4 1983009808
    %v172 = vunpack.c.0.s8 %v171
    %v173 = vlaneseq
    %v174 = vshrl.u32 %v173, 7
    %v175 = vsub.s32 %v172, %v174
    %v176 = vrot.slane %v162, %v175
    %v177 = vcombine.high %v169, %v169
    %v178 = vcombine.high %v176, %v176
    %v179 = vcombine.high %v31, %v31
    %v181 = vunpack.c.l.s4 1983009808
    %v182 = vunpack.c.0.s8 %v181
    %v183 = vlaneseq
    %v184 = vshrl.u32 %v183, 7
    %v185 = vsub.s32 %v182, %v184
    %v186 = vrot.slane %v31, %v185
    %v188 = vunpack.c.l.s4 1983009808
    %v189 = vunpack.c.0.s8 %v188
    %v190 = vlaneseq
    %v191 = vshrl.u32 %v190, 7
    %v192 = vsub.s32 %v189, %v191
    %v193 = vrot.slane %v179, %v192
    %v194 = vcombine.high %v186, %v186
    %v195 = vcombine.high %v193, %v193
    %v204 = vpack.c.bf16 %v169, %v169
    %v205 = vpack.c.bf16 %v177, %v177
    %v206 = vpack.c.bf16 %v176, %v176
    %v207 = vpack.c.bf16 %v178, %v178
    %v208 = vpack.c.bf16 %v186, %v186
    %v209 = vpack.c.bf16 %v194, %v194
    %v210 = vpack.c.bf16 %v193, %v193
    %v211 = vpack.c.bf16 %v195, %v195
    %v340 = vunpack.c.l.b16 %v32
    %v341 = vunpack.c.l.b16 %v33
    %v342 = vunpack.c.l.b16 %v34
    %v343 = vunpack.c.l.b16 %v35
    %v344 = vunpack.c.l.b16 %v36
    %v345 = vunpack.c.l.b16 %v37
    %v346 = vunpack.c.l.b16 %v38
    %v347 = vunpack.c.l.b16 %v39
    %v348 = vunpack.c.l.b16 %v40
    %v349 = vunpack.c.l.b16 %v41
    %v350 = vunpack.c.l.b16 %v42
    %v351 = vunpack.c.l.b16 %v43
    %v352 = vunpack.c.l.b16 %v44
    %v353 = vunpack.c.l.b16 %v45
    %v354 = vunpack.c.l.b16 %v46
    %v355 = vunpack.c.l.b16 %v47
    %v356 = vunpack.c.l.b16 %v48
    %v357 = vunpack.c.l.b16 %v49
    %v358 = vunpack.c.l.b16 %v50
    %v359 = vunpack.c.l.b16 %v51
    %v360 = vunpack.c.l.b16 %v52
    %v361 = vunpack.c.l.b16 %v53
    %v362 = vunpack.c.l.b16 %v54
    %v363 = vunpack.c.l.b16 %v55
    %v364 = vunpack.c.l.b16 %v56
    %v365 = vunpack.c.l.b16 %v57
    %v366 = vunpack.c.l.b16 %v58
    %v367 = vunpack.c.l.b16 %v59
    %v368 = vunpack.c.l.b16 %v60
    %v369 = vunpack.c.l.b16 %v61
    %v370 = vunpack.c.l.b16 %v62
    %v371 = vunpack.c.l.b16 %v63
    %v372 = vunpack.c.l.b16 %v64
    %v373 = vunpack.c.l.b16 %v65
    %v374 = vunpack.c.l.b16 %v66
    %v375 = vunpack.c.l.b16 %v67
    %v376 = vunpack.c.l.b16 %v68
    %v377 = vunpack.c.l.b16 %v69
    %v378 = vunpack.c.l.b16 %v70
    %v379 = vunpack.c.l.b16 %v71
    %v380 = vunpack.c.l.b16 %v72
    %v381 = vunpack.c.l.b16 %v73
    %v382 = vunpack.c.l.b16 %v74
    %v383 = vunpack.c.l.b16 %v75
    %v384 = vunpack.c.l.b16 %v76
    %v385 = vunpack.c.l.b16 %v77
    %v386 = vunpack.c.l.b16 %v78
    %v387 = vunpack.c.l.b16 %v79
    %v388 = vunpack.c.l.b16 %v80
    %v389 = vunpack.c.l.b16 %v81
    %v390 = vunpack.c.l.b16 %v82
    %v391 = vunpack.c.l.b16 %v83
    %v392 = vunpack.c.l.b16 %v84
    %v393 = vunpack.c.l.b16 %v85
    %v394 = vunpack.c.l.b16 %v86
    %v395 = vunpack.c.l.b16 %v87
    %v396 = vunpack.c.l.b16 %v88
    %v397 = vunpack.c.l.b16 %v89
    %v398 = vunpack.c.l.b16 %v90
    %v399 = vunpack.c.l.b16 %v91
    %v400 = vunpack.c.l.b16 %v92
    %v401 = vunpack.c.l.b16 %v93
    %v402 = vunpack.c.l.b16 %v94
    %v403 = vunpack.c.l.b16 %v95
    %v404 = vunpack.c.l.b16 %v96
    %v405 = vunpack.c.l.b16 %v97
    %v406 = vunpack.c.l.b16 %v98
    %v407 = vunpack.c.l.b16 %v99
    %v408 = vunpack.c.l.b16 %v100
    %v409 = vunpack.c.l.b16 %v101
    %v410 = vunpack.c.l.b16 %v102
    %v411 = vunpack.c.l.b16 %v103
    %v412 = vunpack.c.l.b16 %v104
    %v413 = vunpack.c.l.b16 %v105
    %v414 = vunpack.c.l.b16 %v106
    %v415 = vunpack.c.l.b16 %v107
    %v416 = vunpack.c.l.b16 %v108
    %v417 = vunpack.c.l.b16 %v109
    %v418 = vunpack.c.l.b16 %v110
    %v419 = vunpack.c.l.b16 %v111
    %v420 = vunpack.c.l.b16 %v112
    %v421 = vunpack.c.l.b16 %v113
    %v422 = vunpack.c.l.b16 %v114
    %v423 = vunpack.c.l.b16 %v115
    %v424 = vunpack.c.l.b16 %v116
    %v425 = vunpack.c.l.b16 %v117
    %v426 = vunpack.c.l.b16 %v118
    %v427 = vunpack.c.l.b16 %v119
    %v428 = vunpack.c.l.b16 %v120
    %v429 = vunpack.c.l.b16 %v121
    %v430 = vunpack.c.l.b16 %v122
    %v431 = vunpack.c.l.b16 %v123
    %v432 = vunpack.c.l.b16 %v124
    %v433 = vunpack.c.l.b16 %v125
    %v434 = vunpack.c.l.b16 %v126
    %v435 = vunpack.c.l.b16 %v127
    %v436 = vunpack.c.l.b16 %v128
    %v437 = vunpack.c.l.b16 %v129
    %v438 = vunpack.c.l.b16 %v130
    %v439 = vunpack.c.l.b16 %v131
    %v440 = vunpack.c.l.b16 %v132
    %v441 = vunpack.c.l.b16 %v133
    %v442 = vunpack.c.l.b16 %v134
    %v443 = vunpack.c.l.b16 %v135
    %v444 = vunpack.c.l.b16 %v136
    %v445 = vunpack.c.l.b16 %v137
    %v446 = vunpack.c.l.b16 %v138
    %v447 = vunpack.c.l.b16 %v139
    %v448 = vunpack.c.l.b16 %v140
    %v449 = vunpack.c.l.b16 %v141
    %v450 = vunpack.c.l.b16 %v142
    %v451 = vunpack.c.l.b16 %v143
    %v452 = vunpack.c.l.b16 %v144
    %v453 = vunpack.c.l.b16 %v145
    %v454 = vunpack.c.l.b16 %v146
    %v455 = vunpack.c.l.b16 %v147
    %v456 = vunpack.c.l.b16 %v148
    %v457 = vunpack.c.l.b16 %v149
    %v458 = vunpack.c.l.b16 %v150
    %v459 = vunpack.c.l.b16 %v151
    %v460 = vunpack.c.l.b16 %v152
    %v461 = vunpack.c.l.b16 %v153
    %v462 = vunpack.c.l.b16 %v154
    %v463 = vunpack.c.l.b16 %v155
    %v464 = vunpack.c.l.b16 %v156
    %v465 = vunpack.c.l.b16 %v157
    %v466 = vunpack.c.l.b16 %v158
    %v467 = vunpack.c.l.b16 %v159
    %v468 = vpack.c.b16 %v341, %v340
    %v469 = vpack.c.b16 %v343, %v342
    %v470 = vpack.c.b16 %v345, %v344
    %v471 = vpack.c.b16 %v347, %v346
    %v472 = vpack.c.b16 %v349, %v348
    %v473 = vpack.c.b16 %v351, %v350
    %v474 = vpack.c.b16 %v353, %v352
    %v475 = vpack.c.b16 %v355, %v354
    %v476 = vpack.c.b16 %v357, %v356
    %v477 = vpack.c.b16 %v359, %v358
    %v478 = vpack.c.b16 %v361, %v360
    %v479 = vpack.c.b16 %v363, %v362
    %v480 = vpack.c.b16 %v365, %v364
    %v481 = vpack.c.b16 %v367, %v366
    %v482 = vpack.c.b16 %v369, %v368
    %v483 = vpack.c.b16 %v371, %v370
    %v484 = vpack.c.b16 %v373, %v372
    %v485 = vpack.c.b16 %v375, %v374
    %v486 = vpack.c.b16 %v377, %v376
    %v487 = vpack.c.b16 %v379, %v378
    %v488 = vpack.c.b16 %v381, %v380
    %v489 = vpack.c.b16 %v383, %v382
    %v490 = vpack.c.b16 %v385, %v384
    %v491 = vpack.c.b16 %v387, %v386
    %v492 = vpack.c.b16 %v389, %v388
    %v493 = vpack.c.b16 %v391, %v390
    %v494 = vpack.c.b16 %v393, %v392
    %v495 = vpack.c.b16 %v395, %v394
    %v496 = vpack.c.b16 %v397, %v396
    %v497 = vpack.c.b16 %v399, %v398
    %v498 = vpack.c.b16 %v401, %v400
    %v499 = vpack.c.b16 %v403, %v402
    %v500 = vpack.c.b16 %v405, %v404
    %v501 = vpack.c.b16 %v407, %v406
    %v502 = vpack.c.b16 %v409, %v408
    %v503 = vpack.c.b16 %v411, %v410
    %v504 = vpack.c.b16 %v413, %v412
    %v505 = vpack.c.b16 %v415, %v414
    %v506 = vpack.c.b16 %v417, %v416
    %v507 = vpack.c.b16 %v419, %v418
    %v508 = vpack.c.b16 %v421, %v420
    %v509 = vpack.c.b16 %v423, %v422
    %v510 = vpack.c.b16 %v425, %v424
    %v511 = vpack.c.b16 %v427, %v426
    %v512 = vpack.c.b16 %v429, %v428
    %v513 = vpack.c.b16 %v431, %v430
    %v514 = vpack.c.b16 %v433, %v432
    %v515 = vpack.c.b16 %v435, %v434
    %v516 = vpack.c.b16 %v437, %v436
    %v517 = vpack.c.b16 %v439, %v438
    %v518 = vpack.c.b16 %v441, %v440
    %v519 = vpack.c.b16 %v443, %v442
    %v520 = vpack.c.b16 %v445, %v444
    %v521 = vpack.c.b16 %v447, %v446
    %v522 = vpack.c.b16 %v449, %v448
    %v523 = vpack.c.b16 %v451, %v450
    %v524 = vpack.c.b16 %v453, %v452
    %v525 = vpack.c.b16 %v455, %v454
    %v526 = vpack.c.b16 %v457, %v456
    %v527 = vpack.c.b16 %v459, %v458
    %v528 = vpack.c.b16 %v461, %v460
    %v529 = vpack.c.b16 %v463, %v462
    %v530 = vpack.c.b16 %v465, %v464
    %v531 = vpack.c.b16 %v467, %v466
    %596 = vmatprep.subr.bf16.mxu0 0
    %597 = vmatpush1.bf16.msra.mxu0 %v468
    %598 = vmatprep.subr.bf16.mxu0 0
    %599 = vmatpush1.bf16.msra.mxu0 %v469
    %600 = vmatprep.subr.bf16.mxu0 0
    %601 = vmatpush1.bf16.msra.mxu0 %v470
    %602 = vmatprep.subr.bf16.mxu0 0
    %603 = vmatpush1.bf16.msra.mxu0 %v471
    %604 = vmatprep.subr.bf16.mxu0 0
    %605 = vmatpush1.bf16.msra.mxu0 %v472
    %606 = vmatprep.subr.bf16.mxu0 0
    %607 = vmatpush1.bf16.msra.mxu0 %v473
    %608 = vmatprep.subr.bf16.mxu0 0
    %609 = vmatpush1.bf16.msra.mxu0 %v474
    %610 = vmatprep.subr.bf16.mxu0 0
    %611 = vmatpush1.bf16.msra.mxu0 %v475
    %612 = vmatprep.subr.bf16.mxu0 0
    %613 = vmatpush1.bf16.msra.mxu0 %v476
    %614 = vmatprep.subr.bf16.mxu0 0
    %615 = vmatpush1.bf16.msra.mxu0 %v477
    %616 = vmatprep.subr.bf16.mxu0 0
    %617 = vmatpush1.bf16.msra.mxu0 %v478
    %618 = vmatprep.subr.bf16.mxu0 0
    %619 = vmatpush1.bf16.msra.mxu0 %v479
    %620 = vmatprep.subr.bf16.mxu0 0
    %621 = vmatpush1.bf16.msra.mxu0 %v480
    %622 = vmatprep.subr.bf16.mxu0 0
    %623 = vmatpush1.bf16.msra.mxu0 %v481
    %624 = vmatprep.subr.bf16.mxu0 0
    %625 = vmatpush1.bf16.msra.mxu0 %v482
    %626 = vmatprep.subr.bf16.mxu0 0
    %627 = vmatpush1.bf16.msra.mxu0 %v483
    %628 = vmatprep.mubr.bf16.mxu0 %v205
    %629 = vmatmul.mubr.bf16.gmra.mrb[0].mxu0 %v204
    %v630 = vpop.f32.mrb[0].mxu0
    %v631 = vadd.f32 0.0, %v630
    %v632 = vpop.f32.mrb[0].mxu0
    %v633 = vpop.f32.mrb[0].mxu0
    %v634 = vpop.f32.mrb[0].mxu0
    %635 = vdwg.mxu0
    %636 = vmatprep.subr.bf16.mxu0 0
    %637 = vmatpush1.bf16.msra.mxu0 %v484
    %638 = vmatprep.subr.bf16.mxu0 0
    %639 = vmatpush1.bf16.msra.mxu0 %v485
    %640 = vmatprep.subr.bf16.mxu0 0
    %641 = vmatpush1.bf16.msra.mxu0 %v486
    %642 = vmatprep.subr.bf16.mxu0 0
    %643 = vmatpush1.bf16.msra.mxu0 %v487
    %644 = vmatprep.subr.bf16.mxu0 0
    %645 = vmatpush1.bf16.msra.mxu0 %v488
    %646 = vmatprep.subr.bf16.mxu0 0
    %647 = vmatpush1.bf16.msra.mxu0 %v489
    %648 = vmatprep.subr.bf16.mxu0 0
    %649 = vmatpush1.bf16.msra.mxu0 %v490
    %650 = vmatprep.subr.bf16.mxu0 0
    %651 = vmatpush1.bf16.msra.mxu0 %v491
    %652 = vmatprep.subr.bf16.mxu0 0
    %653 = vmatpush1.bf16.msra.mxu0 %v492
    %654 = vmatprep.subr.bf16.mxu0 0
    %655 = vmatpush1.bf16.msra.mxu0 %v493
    %656 = vmatprep.subr.bf16.mxu0 0
    %657 = vmatpush1.bf16.msra.mxu0 %v494
    %658 = vmatprep.subr.bf16.mxu0 0
    %659 = vmatpush1.bf16.msra.mxu0 %v495
    %660 = vmatprep.subr.bf16.mxu0 0
    %661 = vmatpush1.bf16.msra.mxu0 %v496
    %662 = vmatprep.subr.bf16.mxu0 0
    %663 = vmatpush1.bf16.msra.mxu0 %v497
    %664 = vmatprep.subr.bf16.mxu0 0
    %665 = vmatpush1.bf16.msra.mxu0 %v498
    %666 = vmatprep.subr.bf16.mxu0 0
    %667 = vmatpush1.bf16.msra.mxu0 %v499
    %668 = vmatprep.mubr.bf16.mxu0 %v207
    %669 = vmatmul.mubr.bf16.gmra.mrb[0].mxu0 %v206
    %v670 = vpop.f32.mrb[0].mxu0
    %v671 = vadd.f32 %v631, %v670
    %v672 = vpop.f32.mrb[0].mxu0
    %v673 = vpop.f32.mrb[0].mxu0
    %v674 = vpop.f32.mrb[0].mxu0
    %675 = vdwg.mxu0
    %676 = vmatprep.subr.bf16.mxu0 0
    %677 = vmatpush1.bf16.msra.mxu0 %v500
    %678 = vmatprep.subr.bf16.mxu0 0
    %679 = vmatpush1.bf16.msra.mxu0 %v501
    %680 = vmatprep.subr.bf16.mxu0 0
    %681 = vmatpush1.bf16.msra.mxu0 %v502
    %682 = vmatprep.subr.bf16.mxu0 0
    %683 = vmatpush1.bf16.msra.mxu0 %v503
    %684 = vmatprep.subr.bf16.mxu0 0
    %685 = vmatpush1.bf16.msra.mxu0 %v504
    %686 = vmatprep.subr.bf16.mxu0 0
    %687 = vmatpush1.bf16.msra.mxu0 %v505
    %688 = vmatprep.subr.bf16.mxu0 0
    %689 = vmatpush1.bf16.msra.mxu0 %v506
    %690 = vmatprep.subr.bf16.mxu0 0
    %691 = vmatpush1.bf16.msra.mxu0 %v507
    %692 = vmatprep.subr.bf16.mxu0 0
    %693 = vmatpush1.bf16.msra.mxu0 %v508
    %694 = vmatprep.subr.bf16.mxu0 0
    %695 = vmatpush1.bf16.msra.mxu0 %v509
    %696 = vmatprep.subr.bf16.mxu0 0
    %697 = vmatpush1.bf16.msra.mxu0 %v510
    %698 = vmatprep.subr.bf16.mxu0 0
    %699 = vmatpush1.bf16.msra.mxu0 %v511
    %700 = vmatprep.subr.bf16.mxu0 0
    %701 = vmatpush1.bf16.msra.mxu0 %v512
    %702 = vmatprep.subr.bf16.mxu0 0
    %703 = vmatpush1.bf16.msra.mxu0 %v513
    %704 = vmatprep.subr.bf16.mxu0 0
    %705 = vmatpush1.bf16.msra.mxu0 %v514
    %706 = vmatprep.subr.bf16.mxu0 0
    %707 = vmatpush1.bf16.msra.mxu0 %v515
    %708 = vmatprep.mubr.bf16.mxu0 %v209
    %709 = vmatmul.mubr.bf16.gmra.mrb[0].mxu0 %v208
    %v710 = vpop.f32.mrb[0].mxu0
    %v711 = vadd.f32 %v671, %v710
    %v712 = vpop.f32.mrb[0].mxu0
    %v713 = vpop.f32.mrb[0].mxu0
    %v714 = vpop.f32.mrb[0].mxu0
    %715 = vdwg.mxu0
    %716 = vmatprep.subr.bf16.mxu0 0
    %717 = vmatpush1.bf16.msra.mxu0 %v516
    %718 = vmatprep.subr.bf16.mxu0 0
    %719 = vmatpush1.bf16.msra.mxu0 %v517
    %720 = vmatprep.subr.bf16.mxu0 0
    %721 = vmatpush1.bf16.msra.mxu0 %v518
    %722 = vmatprep.subr.bf16.mxu0 0
    %723 = vmatpush1.bf16.msra.mxu0 %v519
    %724 = vmatprep.subr.bf16.mxu0 0
    %725 = vmatpush1.bf16.msra.mxu0 %v520
    %726 = vmatprep.subr.bf16.mxu0 0
    %727 = vmatpush1.bf16.msra.mxu0 %v521
    %728 = vmatprep.subr.bf16.mxu0 0
    %729 = vmatpush1.bf16.msra.mxu0 %v522
    %730 = vmatprep.subr.bf16.mxu0 0
    %731 = vmatpush1.bf16.msra.mxu0 %v523
    %732 = vmatprep.subr.bf16.mxu0 0
    %733 = vmatpush1.bf16.msra.mxu0 %v524
    %734 = vmatprep.subr.bf16.mxu0 0
    %735 = vmatpush1.bf16.msra.mxu0 %v525
    %736 = vmatprep.subr.bf16.mxu0 0
    %737 = vmatpush1.bf16.msra.mxu0 %v526
    %738 = vmatprep.subr.bf16.mxu0 0
    %739 = vmatpush1.bf16.msra.mxu0 %v527
    %740 = vmatprep.subr.bf16.mxu0 0
    %741 = vmatpush1.bf16.msra.mxu0 %v528
    %742 = vmatprep.subr.bf16.mxu0 0
    %743 = vmatpush1.bf16.msra.mxu0 %v529
    %744 = vmatprep.subr.bf16.mxu0 0
    %745 = vmatpush1.bf16.msra.mxu0 %v530
    %746 = vmatprep.subr.bf16.mxu0 0
    %747 = vmatpush1.bf16.msra.mxu0 %v531
    %748 = vmatprep.mubr.bf16.mxu0 %v211
    %749 = vmatmul.mubr.bf16.gmra.mrb[0].mxu0 %v210
    %v750 = vpop.f32.mrb[0].mxu0
    %v751 = vadd.f32 %v711, %v750
    %v752 = vpop.f32.mrb[0].mxu0
    %v753 = vpop.f32.mrb[0].mxu0
    %v754 = vpop.f32.mrb[0].mxu0
    %755 = vdwg.mxu0
    %vm756 = vcmask 1041408
    %v757 = vsel %vm756, %v751, 0.0
    %v758 = vrot.slane %v757, 4
    %v759 = vadd.f32 %v757, %v758
    %v760 = vrot.slane %v759, 2
    %v761 = vadd.f32 %v759, %v760
    %v762 = vrot.slane %v761, 1
    %v763 = vadd.f32 %v761, %v762
    %v764 = vrcp.pop 2.0
    %v765 = vmul.f32 %v763, %v764
    %v766 = vsub.f32 %v751, %v765
    %v767 = vmul.f32 %v766, %v766
    %v768 = vsel %vm756, %v767, 0.0
    %v769 = vrot.slane %v768, 4
    %v770 = vadd.f32 %v768, %v769
    %v771 = vrot.slane %v770, 2
    %v772 = vadd.f32 %v770, %v771
    %v773 = vrot.slane %v772, 1
    %v774 = vadd.f32 %v772, %v773
    %v775 = vmul.f32 %v774, %v764
    %v776 = vadd.f32 %v775, 1e-05
    %v777 = vrsqrt.pop %v776
    %v778 = vmul.f32 %v766, %v777
    %v779 = vmax.f32 %v778, 0.0
    %v780 = vld [vmem:[#allocation2 + $0x200] sm:$0xf]
    %v781 = vld [vmem:[#allocation2 + $0x204] sm:$0xf]
    %v782 = vld [vmem:[#allocation2 + $0x208] sm:$0xf]
    %v783 = vld [vmem:[#allocation2 + $0x20c] sm:$0xf]
    %v784 = vld [vmem:[#allocation2 + $0x210] sm:$0xf]
    %v785 = vld [vmem:[#allocation2 + $0x214] sm:$0xf]
    %v786 = vld [vmem:[#allocation2 + $0x218] sm:$0xf]
    %v787 = vld [vmem:[#allocation2 + $0x21c] sm:$0xf]
    %v788 = vld [vmem:[#allocation2 + $0x220] sm:$0xf]
    %v789 = vld [vmem:[#allocation2 + $0x224] sm:$0xf]
    %v790 = vld [vmem:[#allocation2 + $0x228] sm:$0xf]
    %v791 = vld [vmem:[#allocation2 + $0x22c] sm:$0xf]
    %v792 = vld [vmem:[#allocation2 + $0x230] sm:$0xf]
    %v793 = vld [vmem:[#allocation2 + $0x234] sm:$0xf]
    %v794 = vld [vmem:[#allocation2 + $0x238] sm:$0xf]
    %v795 = vld [vmem:[#allocation2 + $0x23c] sm:$0xf]
    %v796 = vpack.c.bf16 %v779, %v779
    %v813 = vunpack.c.l.b16 %v780
    %v814 = vunpack.c.l.b16 %v781
    %v815 = vunpack.c.l.b16 %v782
    %v816 = vunpack.c.l.b16 %v783
    %v817 = vunpack.c.l.b16 %v784
    %v818 = vunpack.c.l.b16 %v785
    %v819 = vunpack.c.l.b16 %v786
    %v820 = vunpack.c.l.b16 %v787
    %v821 = vunpack.c.l.b16 %v788
    %v822 = vunpack.c.l.b16 %v789
    %v823 = vunpack.c.l.b16 %v790
    %v824 = vunpack.c.l.b16 %v791
    %v825 = vunpack.c.l.b16 %v792
    %v826 = vunpack.c.l.b16 %v793
    %v827 = vunpack.c.l.b16 %v794
    %v828 = vunpack.c.l.b16 %v795
    %v829 = vpack.c.b16 %v814, %v813
    %v830 = vpack.c.b16 %v816, %v815
    %v831 = vpack.c.b16 %v818, %v817
    %v832 = vpack.c.b16 %v820, %v819
    %v833 = vpack.c.b16 %v822, %v821
    %v834 = vpack.c.b16 %v824, %v823
    %v835 = vpack.c.b16 %v826, %v825
    %v836 = vpack.c.b16 %v828, %v827
    %845 = vmatprep.subr.bf16.mxu0 0
    %846 = vmatpush1.bf16.msra.mxu0 %v829
    %847 = vmatprep.subr.bf16.mxu0 0
    %848 = vmatpush1.bf16.msra.mxu0 %v830
    %849 = vmatprep.subr.bf16.mxu0 0
    %850 = vmatpush1.bf16.msra.mxu0 %v831
    %851 = vmatprep.subr.bf16.mxu0 0
    %852 = vmatpush1.bf16.msra.mxu0 %v832
    %853 = vmatprep.subr.bf16.mxu0 0
    %854 = vmatpush1.bf16.msra.mxu0 %v833
    %855 = vmatprep.subr.bf16.mxu0 0
    %856 = vmatpush1.bf16.msra.mxu0 %v834
    %857 = vmatprep.subr.bf16.mxu0 0
    %858 = vmatpush1.bf16.msra.mxu0 %v835
    %859 = vmatprep.subr.bf16.mxu0 0
    %860 = vmatpush1.bf16.msra.mxu0 %v836
    %861 = vmatprep.subr.bf16.mxu0 0
    %862 = vmatpush1.bf16.msra.mxu0 0
    %863 = vmatprep.subr.bf16.mxu0 0
    %864 = vmatpush1.bf16.msra.mxu0 0
    %865 = vmatprep.subr.bf16.mxu0 0
    %866 = vmatpush1.bf16.msra.mxu0 0
    %867 = vmatprep.subr.bf16.mxu0 0
    %868 = vmatpush1.bf16.msra.mxu0 0
    %869 = vmatprep.subr.bf16.mxu0 0
    %870 = vmatpush1.bf16.msra.mxu0 0
    %871 = vmatprep.subr.bf16.mxu0 0
    %872 = vmatpush1.bf16.msra.mxu0 0
    %873 = vmatprep.subr.bf16.mxu0 0
    %874 = vmatpush1.bf16.msra.mxu0 0
    %875 = vmatprep.subr.bf16.mxu0 0
    %876 = vmatpush1.bf16.msra.mxu0 0
    %877 = vmatprep.mubr.bf16.mxu0 0
    %878 = vmatmul.mubr.bf16.gmra.mrb[0].mxu0 %v796
    %v879 = vpop.f32.mrb[0].mxu0
    %v880 = vadd.f32 0.0, %v879
    %v881 = vpop.f32.mrb[0].mxu0
    %v882 = vpop.f32.mrb[0].mxu0
    %v883 = vpop.f32.mrb[0].mxu0
    %884 = vdwg.mxu0
    %v885 = vsel %vm756, %v880, 0.0
    %v886 = vrot.slane %v885, 4
    %v887 = vadd.f32 %v885, %v886
    %v888 = vrot.slane %v887, 2
    %v889 = vadd.f32 %v887, %v888
    %v890 = vrot.slane %v889, 1
    %v891 = vadd.f32 %v889, %v890
    %v892 = vmul.f32 %v891, %v764
    %v893 = vsub.f32 %v880, %v892
    %v894 = vmul.f32 %v893, %v893
    %v895 = vsel %vm756, %v894, 0.0
    %v896 = vrot.slane %v895, 4
    %v897 = vadd.f32 %v895, %v896
    %v898 = vrot.slane %v897, 2
    %v899 = vadd.f32 %v897, %v898
    %v900 = vrot.slane %v899, 1
    %v901 = vadd.f32 %v899, %v900
    %v902 = vmul.f32 %v901, %v764
    %v903 = vadd.f32 %v902, 1e-05
    %v904 = vrsqrt.pop %v903
    %v905 = vmul.f32 %v893, %v904
    %v906 = vmax.f32 %v905, 0.0
    %v907 = vld [vmem:[#allocation2 + $0x240] sm:$0xf]
    %v908 = vld [vmem:[#allocation2 + $0x244] sm:$0xf]
    %v909 = vld [vmem:[#allocation2 + $0x248] sm:$0xf]
    %v910 = vld [vmem:[#allocation2 + $0x24c] sm:$0xf]
    %v911 = vld [vmem:[#allocation2 + $0x250] sm:$0xf]
    %v912 = vld [vmem:[#allocation2 + $0x254] sm:$0xf]
    %v913 = vld [vmem:[#allocation2 + $0x258] sm:$0xf]
    %v914 = vld [vmem:[#allocation2 + $0x25c] sm:$0xf]
    %v915 = vld [vmem:[#allocation2 + $0x260] sm:$0xf]
    %v916 = vld [vmem:[#allocation2 + $0x264] sm:$0xf]
    %v917 = vld [vmem:[#allocation2 + $0x268] sm:$0xf]
    %v918 = vld [vmem:[#allocation2 + $0x26c] sm:$0xf]
    %v919 = vld [vmem:[#allocation2 + $0x270] sm:$0xf]
    %v920 = vld [vmem:[#allocation2 + $0x274] sm:$0xf]
    %v921 = vld [vmem:[#allocation2 + $0x278] sm:$0xf]
    %v922 = vld [vmem:[#allocation2 + $0x27c] sm:$0xf]
    %v923 = vpack.c.bf16 %v906, %v906
    %v940 = vunpack.c.l.b16 %v907
    %v941 = vunpack.c.l.b16 %v908
    %v942 = vunpack.c.l.b16 %v909
    %v943 = vunpack.c.l.b16 %v910
    %v944 = vunpack.c.l.b16 %v911
    %v945 = vunpack.c.l.b16 %v912
    %v946 = vunpack.c.l.b16 %v913
    %v947 = vunpack.c.l.b16 %v914
    %v948 = vunpack.c.l.b16 %v915
    %v949 = vunpack.c.l.b16 %v916
    %v950 = vunpack.c.l.b16 %v917
    %v951 = vunpack.c.l.b16 %v918
    %v952 = vunpack.c.l.b16 %v919
    %v953 = vunpack.c.l.b16 %v920
    %v954 = vunpack.c.l.b16 %v921
    %v955 = vunpack.c.l.b16 %v922
    %v956 = vpack.c.b16 %v941, %v940
    %v957 = vpack.c.b16 %v943, %v942
    %v958 = vpack.c.b16 %v945, %v944
    %v959 = vpack.c.b16 %v947, %v946
    %v960 = vpack.c.b16 %v949, %v948
    %v961 = vpack.c.b16 %v951, %v950
    %v962 = vpack.c.b16 %v953, %v952
    %v963 = vpack.c.b16 %v955, %v954
    %972 = vmatprep.subr.bf16.mxu0 0
    %973 = vmatpush1.bf16.msra.mxu0 %v956
    %974 = vmatprep.subr.bf16.mxu0 0
    %975 = vmatpush1.bf16.msra.mxu0 %v957
    %976 = vmatprep.subr.bf16.mxu0 0
    %977 = vmatpush1.bf16.msra.mxu0 %v958
    %978 = vmatprep.subr.bf16.mxu0 0
    %979 = vmatpush1.bf16.msra.mxu0 %v959
    %980 = vmatprep.subr.bf16.mxu0 0
    %981 = vmatpush1.bf16.msra.mxu0 %v960
    %982 = vmatprep.subr.bf16.mxu0 0
    %983 = vmatpush1.bf16.msra.mxu0 %v961
    %984 = vmatprep.subr.bf16.mxu0 0
    %985 = vmatpush1.bf16.msra.mxu0 %v962
    %986 = vmatprep.subr.bf16.mxu0 0
    %987 = vmatpush1.bf16.msra.mxu0 %v963
    %988 = vmatprep.subr.bf16.mxu0 0
    %989 = vmatpush1.bf16.msra.mxu0 0
    %990 = vmatprep.subr.bf16.mxu0 0
    %991 = vmatpush1.bf16.msra.mxu0 0
    %992 = vmatprep.subr.bf16.mxu0 0
    %993 = vmatpush1.bf16.msra.mxu0 0
    %994 = vmatprep.subr.bf16.mxu0 0
    %995 = vmatpush1.bf16.msra.mxu0 0
    %996 = vmatprep.subr.bf16.mxu0 0
    %997 = vmatpush1.bf16.msra.mxu0 0
    %998 = vmatprep.subr.bf16.mxu0 0
    %999 = vmatpush1.bf16.msra.mxu0 0
    %1000 = vmatprep.subr.bf16.mxu0 0
    %1001 = vmatpush1.bf16.msra.mxu0 0
    %1002 = vmatprep.subr.bf16.mxu0 0
    %1003 = vmatpush1.bf16.msra.mxu0 0
    %1004 = vmatprep.mubr.bf16.mxu0 0
    %1005 = vmatmul.mubr.bf16.gmra.mrb[0].mxu0 %v923
    %v1006 = vpop.f32.mrb[0].mxu0
    %v1007 = vadd.f32 0.0, %v1006
    %v1008 = vpop.f32.mrb[0].mxu0
    %v1009 = vpop.f32.mrb[0].mxu0
    %v1010 = vpop.f32.mrb[0].mxu0
    %1011 = vdwg.mxu0
    %v1012 = vsel %vm756, %v1007, 0.0
    %v1013 = vrot.slane %v1012, 4
    %v1014 = vadd.f32 %v1012, %v1013
    %v1015 = vrot.slane %v1014, 2
    %v1016 = vadd.f32 %v1014, %v1015
    %v1017 = vrot.slane %v1016, 1
    %v1018 = vadd.f32 %v1016, %v1017
    %v1019 = vmul.f32 %v1018, %v764
    %v1020 = vsub.f32 %v1007, %v1019
    %v1021 = vmul.f32 %v1020, %v1020
    %v1022 = vsel %vm756, %v1021, 0.0
    %v1023 = vrot.slane %v1022, 4
    %v1024 = vadd.f32 %v1022, %v1023
    %v1025 = vrot.slane %v1024, 2
    %v1026 = vadd.f32 %v1024, %v1025
    %v1027 = vrot.slane %v1026, 1
    %v1028 = vadd.f32 %v1026, %v1027
    %v1029 = vmul.f32 %v1028, %v764
    %v1030 = vadd.f32 %v1029, 1e-05
    %v1031 = vrsqrt.pop %v1030
    %v1032 = vmul.f32 %v1020, %v1031
    %v1033 = vadd.f32 %v1032, %v779
    %v1034 = vmax.f32 %v1033, 0.0
    %v1035 = vld [vmem:[#allocation2 + $0x280] sm:$0xf]
    %v1036 = vld [vmem:[#allocation2 + $0x284] sm:$0xf]
    %v1037 = vld [vmem:[#allocation2 + $0x288] sm:$0xf]
    %v1038 = vld [vmem:[#allocation2 + $0x28c] sm:$0xf]
    %v1039 = vld [vmem:[#allocation2 + $0x290] sm:$0xf]
    %v1040 = vld [vmem:[#allocation2 + $0x294] sm:$0xf]
    %v1041 = vld [vmem:[#allocation2 + $0x298] sm:$0xf]
    %v1042 = vld [vmem:[#allocation2 + $0x29c] sm:$0xf]
    %v1043 = vld [vmem:[#allocation2 + $0x2a0] sm:$0xf]
    %v1044 = vld [vmem:[#allocation2 + $0x2a4] sm:$0xf]
    %v1045 = vld [vmem:[#allocation2 + $0x2a8] sm:$0xf]
    %v1046 = vld [vmem:[#allocation2 + $0x2ac] sm:$0xf]
    %v1047 = vld [vmem:[#allocation2 + $0x2b0] sm:$0xf]
    %v1048 = vld [vmem:[#allocation2 + $0x2b4] sm:$0xf]
    %v1049 = vld [vmem:[#allocation2 + $0x2b8] sm:$0xf]
    %v1050 = vld [vmem:[#allocation2 + $0x2bc] sm:$0xf]
    %v1051 = vpack.c.bf16 %v1034, %v1034
    %v1068 = vunpack.c.l.b16 %v1035
    %v1069 = vunpack.c.l.b16 %v1036
    %v1070 = vunpack.c.l.b16 %v1037
    %v1071 = vunpack.c.l.b16 %v1038
    %v1072 = vunpack.c.l.b16 %v1039
    %v1073 = vunpack.c.l.b16 %v1040
    %v1074 = vunpack.c.l.b16 %v1041
    %v1075 = vunpack.c.l.b16 %v1042
    %v1076 = vunpack.c.l.b16 %v1043
    %v1077 = vunpack.c.l.b16 %v1044
    %v1078 = vunpack.c.l.b16 %v1045
    %v1079 = vunpack.c.l.b16 %v1046
    %v1080 = vunpack.c.l.b16 %v1047
    %v1081 = vunpack.c.l.b16 %v1048
    %v1082 = vunpack.c.l.b16 %v1049
    %v1083 = vunpack.c.l.b16 %v1050
    %v1084 = vpack.c.b16 %v1069, %v1068
    %v1085 = vpack.c.b16 %v1071, %v1070
    %v1086 = vpack.c.b16 %v1073, %v1072
    %v1087 = vpack.c.b16 %v1075, %v1074
    %v1088 = vpack.c.b16 %v1077, %v1076
    %v1089 = vpack.c.b16 %v1079, %v1078
    %v1090 = vpack.c.b16 %v1081, %v1080
    %v1091 = vpack.c.b16 %v1083, %v1082
    %1100 = vmatprep.subr.bf16.mxu0 0
    %1101 = vmatpush1.bf16.msra.mxu0 %v1084
    %1102 = vmatprep.subr.bf16.mxu0 0
    %1103 = vmatpush1.bf16.msra.mxu0 %v1085
    %1104 = vmatprep.subr.bf16.mxu0 0
    %1105 = vmatpush1.bf16.msra.mxu0 %v1086
    %1106 = vmatprep.subr.bf16.mxu0 0
    %1107 = vmatpush1.bf16.msra.mxu0 %v1087
    %1108 = vmatprep.subr.bf16.mxu0 0
    %1109 = vmatpush1.bf16.msra.mxu0 %v1088
    %1110 = vmatprep.subr.bf16.mxu0 0
    %1111 = vmatpush1.bf16.msra.mxu0 %v1089
    %1112 = vmatprep.subr.bf16.mxu0 0
    %1113 = vmatpush1.bf16.msra.mxu0 %v1090
    %1114 = vmatprep.subr.bf16.mxu0 0
    %1115 = vmatpush1.bf16.msra.mxu0 %v1091
    %1116 = vmatprep.subr.bf16.mxu0 0
    %1117 = vmatpush1.bf16.msra.mxu0 0
    %1118 = vmatprep.subr.bf16.mxu0 0
    %1119 = vmatpush1.bf16.msra.mxu0 0
    %1120 = vmatprep.subr.bf16.mxu0 0
    %1121 = vmatpush1.bf16.msra.mxu0 0
    %1122 = vmatprep.subr.bf16.mxu0 0
    %1123 = vmatpush1.bf16.msra.mxu0 0
    %1124 = vmatprep.subr.bf16.mxu0 0
    %1125 = vmatpush1.bf16.msra.mxu0 0
    %1126 = vmatprep.subr.bf16.mxu0 0
    %1127 = vmatpush1.bf16.msra.mxu0 0
    %1128 = vmatprep.subr.bf16.mxu0 0
    %1129 = vmatpush1.bf16.msra.mxu0 0
    %1130 = vmatprep.subr.bf16.mxu0 0
    %1131 = vmatpush1.bf16.msra.mxu0 0
    %1132 = vmatprep.mubr.bf16.mxu0 0
    %1133 = vmatmul.mubr.bf16.gmra.mrb[0].mxu0 %v1051
    %v1134 = vpop.f32.mrb[0].mxu0
    %v1135 = vadd.f32 0.0, %v1134
    %v1136 = vpop.f32.mrb[0].mxu0
    %v1137 = vpop.f32.mrb[0].mxu0
    %v1138 = vpop.f32.mrb[0].mxu0
    %1139 = vdwg.mxu0
    %v1140 = vsel %vm756, %v1135, 0.0
    %v1141 = vrot.slane %v1140, 4
    %v1142 = vadd.f32 %v1140, %v1141
    %v1143 = vrot.slane %v1142, 2
    %v1144 = vadd.f32 %v1142, %v1143
    %v1145 = vrot.slane %v1144, 1
    %v1146 = vadd.f32 %v1144, %v1145
    %v1147 = vmul.f32 %v1146, %v764
    %v1148 = vsub.f32 %v1135, %v1147
    %v1149 = vmul.f32 %v1148, %v1148
    %v1150 = vsel %vm756, %v1149, 0.0
    %v1151 = vrot.slane %v1150, 4
    %v1152 = vadd.f32 %v1150, %v1151
    %v1153 = vrot.slane %v1152, 2
    %v1154 = vadd.f32 %v1152, %v1153
    %v1155 = vrot.slane %v1154, 1
    %v1156 = vadd.f32 %v1154, %v1155
    %v1157 = vmul.f32 %v1156, %v764
    %v1158 = vadd.f32 %v1157, 1e-05
    %v1159 = vrsqrt.pop %v1158
    %v1160 = vmul.f32 %v1148, %v1159
    %v1161 = vmax.f32 %v1160, 0.0
    %v1162 = vld [vmem:[#allocation2 + $0x2c0] sm:$0xf]
    %v1163 = vld [vmem:[#allocation2 + $0x2c4] sm:$0xf]
    %v1164 = vld [vmem:[#allocation2 + $0x2c8] sm:$0xf]
    %v1165 = vld [vmem:[#allocation2 + $0x2cc] sm:$0xf]
    %v1166 = vld [vmem:[#allocation2 + $0x2d0] sm:$0xf]
    %v1167 = vld [vmem:[#allocation2 + $0x2d4] sm:$0xf]
    %v1168 = vld [vmem:[#allocation2 + $0x2d8] sm:$0xf]
    %v1169 = vld [vmem:[#allocation2 + $0x2dc] sm:$0xf]
    %v1170 = vld [vmem:[#allocation2 + $0x2e0] sm:$0xf]
    %v1171 = vld [vmem:[#allocation2 + $0x2e4] sm:$0xf]
    %v1172 = vld [vmem:[#allocation2 + $0x2e8] sm:$0xf]
    %v1173 = vld [vmem:[#allocation2 + $0x2ec] sm:$0xf]
    %v1174 = vld [vmem:[#allocation2 + $0x2f0] sm:$0xf]
    %v1175 = vld [vmem:[#allocation2 + $0x2f4] sm:$0xf]
    %v1176 = vld [vmem:[#allocation2 + $0x2f8] sm:$0xf]
    %v1177 = vld [vmem:[#allocation2 + $0x2fc] sm:$0xf]
    %v1178 = vpack.c.bf16 %v1161, %v1161
    %v1195 = vunpack.c.l.b16 %v1162
    %v1196 = vunpack.c.l.b16 %v1163
    %v1197 = vunpack.c.l.b16 %v1164
    %v1198 = vunpack.c.l.b16 %v1165
    %v1199 = vunpack.c.l.b16 %v1166
    %v1200 = vunpack.c.l.b16 %v1167
    %v1201 = vunpack.c.l.b16 %v1168
    %v1202 = vunpack.c.l.b16 %v1169
    %v1203 = vunpack.c.l.b16 %v1170
    %v1204 = vunpack.c.l.b16 %v1171
    %v1205 = vunpack.c.l.b16 %v1172
    %v1206 = vunpack.c.l.b16 %v1173
    %v1207 = vunpack.c.l.b16 %v1174
    %v1208 = vunpack.c.l.b16 %v1175
    %v1209 = vunpack.c.l.b16 %v1176
    %v1210 = vunpack.c.l.b16 %v1177
    %v1211 = vpack.c.b16 %v1196, %v1195
    %v1212 = vpack.c.b16 %v1198, %v1197
    %v1213 = vpack.c.b16 %v1200, %v1199
    %v1214 = vpack.c.b16 %v1202, %v1201
    %v1215 = vpack.c.b16 %v1204, %v1203
    %v1216 = vpack.c.b16 %v1206, %v1205
    %v1217 = vpack.c.b16 %v1208, %v1207
    %v1218 = vpack.c.b16 %v1210, %v1209
    %1227 = vmatprep.subr.bf16.mxu0 0
    %1228 = vmatpush1.bf16.msra.mxu0 %v1211
    %1229 = vmatprep.subr.bf16.mxu0 0
    %1230 = vmatpush1.bf16.msra.mxu0 %v1212
    %1231 = vmatprep.subr.bf16.mxu0 0
    %1232 = vmatpush1.bf16.msra.mxu0 %v1213
    %1233 = vmatprep.subr.bf16.mxu0 0
    %1234 = vmatpush1.bf16.msra.mxu0 %v1214
    %1235 = vmatprep.subr.bf16.mxu0 0
    %1236 = vmatpush1.bf16.msra.mxu0 %v1215
    %1237 = vmatprep.subr.bf16.mxu0 0
    %1238 = vmatpush1.bf16.msra.mxu0 %v1216
    %1239 = vmatprep.subr.bf16.mxu0 0
    %1240 = vmatpush1.bf16.msra.mxu0 %v1217
    %1241 = vmatprep.subr.bf16.mxu0 0
    %1242 = vmatpush1.bf16.msra.mxu0 %v1218
    %1243 = vmatprep.subr.bf16.mxu0 0
    %1244 = vmatpush1.bf16.msra.mxu0 0
    %1245 = vmatprep.subr.bf16.mxu0 0
    %1246 = vmatpush1.bf16.msra.mxu0 0
    %1247 = vmatprep.subr.bf16.mxu0 0
    %1248 = vmatpush1.bf16.msra.mxu0 0
    %1249 = vmatprep.subr.bf16.mxu0 0
    %1250 = vmatpush1.bf16.msra.mxu0 0
    %1251 = vmatprep.subr.bf16.mxu0 0
    %1252 = vmatpush1.bf16.msra.mxu0 0
    %1253 = vmatprep.subr.bf16.mxu0 0
    %1254 = vmatpush1.bf16.msra.mxu0 0
    %1255 = vmatprep.subr.bf16.mxu0 0
    %1256 = vmatpush1.bf16.msra.mxu0 0
    %1257 = vmatprep.subr.bf16.mxu0 0
    %1258 = vmatpush1.bf16.msra.mxu0 0
    %1259 = vmatprep.mubr.bf16.mxu0 0
    %1260 = vmatmul.mubr.bf16.gmra.mrb[0].mxu0 %v1178
    %v1261 = vpop.f32.mrb[0].mxu0
    %v1262 = vadd.f32 0.0, %v1261
    %v1263 = vpop.f32.mrb[0].mxu0
    %v1264 = vpop.f32.mrb[0].mxu0
    %v1265 = vpop.f32.mrb[0].mxu0
    %1266 = vdwg.mxu0
    %v1267 = vsel %vm756, %v1262, 0.0
    %v1268 = vrot.slane %v1267, 4
    %v1269 = vadd.f32 %v1267, %v1268
    %v1270 = vrot.slane %v1269, 2
    %v1271 = vadd.f32 %v1269, %v1270
    %v1272 = vrot.slane %v1271, 1
    %v1273 = vadd.f32 %v1271, %v1272
    %v1274 = vmul.f32 %v1273, %v764
    %v1275 = vsub.f32 %v1262, %v1274
    %v1276 = vmul.f32 %v1275, %v1275
    %v1277 = vsel %vm756, %v1276, 0.0
    %v1278 = vrot.slane %v1277, 4
    %v1279 = vadd.f32 %v1277, %v1278
    %v1280 = vrot.slane %v1279, 2
    %v1281 = vadd.f32 %v1279, %v1280
    %v1282 = vrot.slane %v1281, 1
    %v1283 = vadd.f32 %v1281, %v1282
    %v1284 = vmul.f32 %v1283, %v764
    %v1285 = vadd.f32 %v1284, 1e-05
    %v1286 = vrsqrt.pop %v1285
    %v1287 = vmul.f32 %v1275, %v1286
    %v1288 = vld [vmem:[#allocation2 + $0x300] sm:$0xf]
    %v1289 = vld [vmem:[#allocation2 + $0x304] sm:$0xf]
    %v1290 = vld [vmem:[#allocation2 + $0x308] sm:$0xf]
    %v1291 = vld [vmem:[#allocation2 + $0x30c] sm:$0xf]
    %v1292 = vld [vmem:[#allocation2 + $0x310] sm:$0xf]
    %v1293 = vld [vmem:[#allocation2 + $0x314] sm:$0xf]
    %v1294 = vld [vmem:[#allocation2 + $0x318] sm:$0xf]
    %v1295 = vld [vmem:[#allocation2 + $0x31c] sm:$0xf]
    %v1296 = vld [vmem:[#allocation2 + $0x320] sm:$0xf]
    %v1297 = vld [vmem:[#allocation2 + $0x324] sm:$0xf]
    %v1298 = vld [vmem:[#allocation2 + $0x328] sm:$0xf]
    %v1299 = vld [vmem:[#allocation2 + $0x32c] sm:$0xf]
    %v1300 = vld [vmem:[#allocation2 + $0x330] sm:$0xf]
    %v1301 = vld [vmem:[#allocation2 + $0x334] sm:$0xf]
    %v1302 = vld [vmem:[#allocation2 + $0x338] sm:$0xf]
    %v1303 = vld [vmem:[#allocation2 + $0x33c] sm:$0xf]
    %v1304 = vld [vmem:[%s2] sm:$0x1]
    %v1305 = vlaneseq
    %v1306 = vshrl.u32 %v1305, 7
    %v1307 = vsub.s32 0, %v1306
    %v1308 = vrot.slane %v1304, %v1307
    %v1325 = vunpack.c.l.b16 %v1288
    %v1326 = vunpack.c.l.b16 %v1289
    %v1327 = vunpack.c.l.b16 %v1290
    %v1328 = vunpack.c.l.b16 %v1291
    %v1329 = vunpack.c.l.b16 %v1292
    %v1330 = vunpack.c.l.b16 %v1293
    %v1331 = vunpack.c.l.b16 %v1294
    %v1332 = vunpack.c.l.b16 %v1295
    %v1333 = vunpack.c.l.b16 %v1296
    %v1334 = vunpack.c.l.b16 %v1297
    %v1335 = vunpack.c.l.b16 %v1298
    %v1336 = vunpack.c.l.b16 %v1299
    %v1337 = vunpack.c.l.b16 %v1300
    %v1338 = vunpack.c.l.b16 %v1301
    %v1339 = vunpack.c.l.b16 %v1302
    %v1340 = vunpack.c.l.b16 %v1303
    %v1341 = vpack.c.b16 %v1326, %v1325
    %v1342 = vpack.c.b16 %v1328, %v1327
    %v1343 = vpack.c.b16 %v1330, %v1329
    %v1344 = vpack.c.b16 %v1332, %v1331
    %v1345 = vpack.c.b16 %v1334, %v1333
    %v1346 = vpack.c.b16 %v1336, %v1335
    %v1347 = vpack.c.b16 %v1338, %v1337
    %v1348 = vpack.c.b16 %v1340, %v1339
    %1357 = vmatprep.subr.bf16.mxu0 0
    %1358 = vmatpush1.bf16.msra.mxu0 %v1341
    %1359 = vmatprep.subr.bf16.mxu0 0
    %1360 = vmatpush1.bf16.msra.mxu0 %v1342
    %1361 = vmatprep.subr.bf16.mxu0 0
    %1362 = vmatpush1.bf16.msra.mxu0 %v1343
    %1363 = vmatprep.subr.bf16.mxu0 0
    %1364 = vmatpush1.bf16.msra.mxu0 %v1344
    %1365 = vmatprep.subr.bf16.mxu0 0
    %1366 = vmatpush1.bf16.msra.mxu0 %v1345
    %1367 = vmatprep.subr.bf16.mxu0 0
    %1368 = vmatpush1.bf16.msra.mxu0 %v1346
    %1369 = vmatprep.subr.bf16.mxu0 0
    %1370 = vmatpush1.bf16.msra.mxu0 %v1347
    %1371 = vmatprep.subr.bf16.mxu0 0
    %1372 = vmatpush1.bf16.msra.mxu0 %v1348
    %1373 = vmatprep.subr.bf16.mxu0 0
    %1374 = vmatpush1.bf16.msra.mxu0 0
    %1375 = vmatprep.subr.bf16.mxu0 0
    %1376 = vmatpush1.bf16.msra.mxu0 0
    %1377 = vmatprep.subr.bf16.mxu0 0
    %1378 = vmatpush1.bf16.msra.mxu0 0
    %1379 = vmatprep.subr.bf16.mxu0 0
    %1380 = vmatpush1.bf16.msra.mxu0 0
    %1381 = vmatprep.subr.bf16.mxu0 0
    %1382 = vmatpush1.bf16.msra.mxu0 0
    %1383 = vmatprep.subr.bf16.mxu0 0
    %1384 = vmatpush1.bf16.msra.mxu0 0
    %1385 = vmatprep.subr.bf16.mxu0 0
    %1386 = vmatpush1.bf16.msra.mxu0 0
    %1387 = vmatprep.subr.bf16.mxu0 0
    %1388 = vmatpush1.bf16.msra.mxu0 0
    %1389 = vmatprep.mubr.bf16.mxu0 0
    %1390 = vmatmul.mubr.bf16.gmra.mrb[0].mxu0 %v1051
    %v1391 = vpop.f32.mrb[0].mxu0
    %v1392 = vadd.f32 %v1308, %v1391
    %v1393 = vpop.f32.mrb[0].mxu0
    %v1394 = vpop.f32.mrb[0].mxu0
    %v1395 = vpop.f32.mrb[0].mxu0
    %1396 = vdwg.mxu0
    %v1397 = vadd.f32 %v1287, %v1392
    %v1398 = vmax.f32 %v1397, 0.0
    %v1399 = vld [vmem:[#allocation2 + $0x340] sm:$0xf]
    %v1400 = vld [vmem:[#allocation2 + $0x344] sm:$0xf]
    %v1401 = vld [vmem:[#allocation2 + $0x348] sm:$0xf]
    %v1402 = vld [vmem:[#allocation2 + $0x34c] sm:$0xf]
    %v1403 = vld [vmem:[#allocation2 + $0x350] sm:$0xf]
    %v1404 = vld [vmem:[#allocation2 + $0x354] sm:$0xf]
    %v1405 = vld [vmem:[#allocation2 + $0x358] sm:$0xf]
    %v1406 = vld [vmem:[#allocation2 + $0x35c] sm:$0xf]
    %v1407 = vld [vmem:[#allocation2 + $0x360] sm:$0xf]
    %v1408 = vld [vmem:[#allocation2 + $0x364] sm:$0xf]
    %v1409 = vld [vmem:[#allocation2 + $0x368] sm:$0xf]
    %v1410 = vld [vmem:[#allocation2 + $0x36c] sm:$0xf]
    %v1411 = vld [vmem:[#allocation2 + $0x370] sm:$0xf]
    %v1412 = vld [vmem:[#allocation2 + $0x374] sm:$0xf]
    %v1413 = vld [vmem:[#allocation2 + $0x378] sm:$0xf]
    %v1414 = vld [vmem:[#allocation2 + $0x37c] sm:$0xf]
    %v1415 = vpack.c.bf16 %v1398, %v1398
    %v1416 = vld [vmem:[%s2 + $0x1] sm:$0x1]
    %v1417 = vlaneseq
    %v1418 = vshrl.u32 %v1417, 7
    %v1419 = vsub.s32 0, %v1418
    %v1420 = vrot.slane %v1416, %v1419
    %v1437 = vunpack.c.l.b16 %v1399
    %v1438 = vunpack.c.l.b16 %v1400
    %v1439 = vunpack.c.l.b16 %v1401
    %v1440 = vunpack.c.l.b16 %v1402
    %v1441 = vunpack.c.l.b16 %v1403
    %v1442 = vunpack.c.l.b16 %v1404
    %v1443 = vunpack.c.l.b16 %v1405
    %v1444 = vunpack.c.l.b16 %v1406
    %v1445 = vunpack.c.l.b16 %v1407
    %v1446 = vunpack.c.l.b16 %v1408
    %v1447 = vunpack.c.l.b16 %v1409
    %v1448 = vunpack.c.l.b16 %v1410
    %v1449 = vunpack.c.l.b16 %v1411
    %v1450 = vunpack.c.l.b16 %v1412
    %v1451 = vunpack.c.l.b16 %v1413
    %v1452 = vunpack.c.l.b16 %v1414
    %v1453 = vpack.c.b16 %v1438, %v1437
    %v1454 = vpack.c.b16 %v1440, %v1439
    %v1455 = vpack.c.b16 %v1442, %v1441
    %v1456 = vpack.c.b16 %v1444, %v1443
    %v1457 = vpack.c.b16 %v1446, %v1445
    %v1458 = vpack.c.b16 %v1448, %v1447
    %v1459 = vpack.c.b16 %v1450, %v1449
    %v1460 = vpack.c.b16 %v1452, %v1451
    %1469 = vmatprep.subr.bf16.mxu0 0
    %1470 = vmatpush1.bf16.msra.mxu0 %v1453
    %1471 = vmatprep.subr.bf16.mxu0 0
    %1472 = vmatpush1.bf16.msra.mxu0 %v1454
    %1473 = vmatprep.subr.bf16.mxu0 0
    %1474 = vmatpush1.bf16.msra.mxu0 %v1455
    %1475 = vmatprep.subr.bf16.mxu0 0
    %1476 = vmatpush1.bf16.msra.mxu0 %v1456
    %1477 = vmatprep.subr.bf16.mxu0 0
    %1478 = vmatpush1.bf16.msra.mxu0 %v1457
    %1479 = vmatprep.subr.bf16.mxu0 0
    %1480 = vmatpush1.bf16.msra.mxu0 %v1458
    %1481 = vmatprep.subr.bf16.mxu0 0
    %1482 = vmatpush1.bf16.msra.mxu0 %v1459
    %1483 = vmatprep.subr.bf16.mxu0 0
    %1484 = vmatpush1.bf16.msra.mxu0 %v1460
    %1485 = vmatprep.subr.bf16.mxu0 0
    %1486 = vmatpush1.bf16.msra.mxu0 0
    %1487 = vmatprep.subr.bf16.mxu0 0
    %1488 = vmatpush1.bf16.msra.mxu0 0
    %1489 = vmatprep.subr.bf16.mxu0 0
    %1490 = vmatpush1.bf16.msra.mxu0 0
    %1491 = vmatprep.subr.bf16.mxu0 0
    %1492 = vmatpush1.bf16.msra.mxu0 0
    %1493 = vmatprep.subr.bf16.mxu0 0
    %1494 = vmatpush1.bf16.msra.mxu0 0
    %1495 = vmatprep.subr.bf16.mxu0 0
    %1496 = vmatpush1.bf16.msra.mxu0 0
    %1497 = vmatprep.subr.bf16.mxu0 0
    %1498 = vmatpush1.bf16.msra.mxu0 0
    %1499 = vmatprep.subr.bf16.mxu0 0
    %1500 = vmatpush1.bf16.msra.mxu0 0
    %1501 = vmatprep.mubr.bf16.mxu0 0
    %1502 = vmatmul.mubr.bf16.gmra.mrb[0].mxu0 %v1415
    %v1503 = vpop.f32.mrb[0].mxu0
    %v1504 = vadd.f32 %v1420, %v1503
    %v1505 = vpop.f32.mrb[0].mxu0
    %v1506 = vpop.f32.mrb[0].mxu0
    %v1507 = vpop.f32.mrb[0].mxu0
    %1508 = vdwg.mxu0
    %1509 = vst [vmem:[#allocation5] sm:$0x3] %v1504
    // Predicated region
    $region18: #{_forward.1} parent=1 // pred_check
      _
    $region19: #{_forward.1} parent=1 // pred_check_branch
      %1511 = sbr.rel (0) target = $region21
    $region20: #{_forward.1} parent=1 // pred_region
      %s1513 = ssub.s32 32, 32
      %1514 = vsyncadd [#allocation4], %s1513
      %s1516 = sshll.u32 [#allocation5], 4
      %s1517 = int_to_ptr.vmem [resolvable:$true] %s1516
      %1519 = dma.vmem_to_hbm [thread:$0]  %s1517, 32, %s3, [#allocation4]
    $region21: #{_forward.1} parent=1 // pred_fallthru
      _
    // Predicated region
    $region22: #{_forward.1} parent=1 // pred_check
      _
    $region23: #{_forward.1} parent=1 // pred_check_branch
      %1521 = sbr.rel (0) target = $region25
    $region24: #{_forward.1} parent=1 // pred_region
      %1522 = dma.done [#allocation4], 32
    $region25: #{_forward.1} parent=1 // pred_fallthru
      _
    %1523 = vsyncpa [#allocation3], 1
    %1524 = vsyncpa [#allocation4], 1

</llo_original>
